<compile_context>
chip_gen: v7x
topology: tpu7x:2x2x1
jax: 0.10.0
libtpu: 0.0.40
codegen_flags: <defaults>
</compile_context>

<pallas_src>
import math
import functools

import jax
import jax.numpy as jnp
from jax import lax
from jax.experimental import pallas as pl
from jax.experimental.pallas import tpu as pltpu


# ---------------------------------------------------------------------------
# Kernel: one grid step = one (batch, query-tile) pair.
# ---------------------------------------------------------------------------
def _block_kernel(x_ref,                          # (1, S, E) full sequence
                  wq_ref, bq_ref,                 # (H, E, Dh), (H, 1, Dh) — pre-scaled
                  wkv_ref, bkv_ref,               # (H, E, 2Dh), (H, 1, 2Dh)
                  wo_ref, bo_ref,                 # (H, Dh, E), (1, E)
                  ln1w_ref, ln1b_ref,
                  w1_ref, b1_ref, w2_ref, b2_ref,
                  ln2w_ref, ln2b_ref,
                  o_ref,                          # (1, TQ, E)
                  k_cache, v_cache,               # (H, S, Dh) VMEM scratch each
                  *, n_head, head_dim, tq, eps, compute_dtype, approx_softmax):
    cd = compute_dtype
    Dh = head_dim
    E = o_ref.shape[-1]
    q_idx = pl.program_id(1)

    # ---- fill per-batch K/V cache once, reuse for all query tiles of b ----
    @pl.when(q_idx == 0)
    def _fill_kv_cache():
        xs = x_ref[0].astype(cd)                                        # (S, E)

        @pl.loop(0, n_head)
        def _(h):
            kv = jnp.dot(xs, wkv_ref[h].astype(cd),
                         preferred_element_type=jnp.float32) + bkv_ref[h]   # (S, 2Dh)
            k_cache[h] = kv[:, :Dh].astype(k_cache.dtype)
            v_cache[h] = kv[:, Dh:].astype(v_cache.dtype)

    # ---- query tile (sliced out of the resident full-sequence block) ----
    row0 = pl.multiple_of(q_idx * tq, tq)
    xq = x_ref[0, pl.ds(row0, tq), :].astype(jnp.float32)               # (TQ, E)
    xq_c = xq.astype(cd)

    # ---- attention: heads accumulate straight through the output proj ----
    def head_body(h, acc):
        qh = jnp.dot(xq_c, wq_ref[h].astype(cd),
                     preferred_element_type=jnp.float32) + bq_ref[h]    # (TQ, Dh), scaled
        # scores via rhs-contraction (no explicit K transpose)
        s = lax.dot_general(qh.astype(cd), k_cache[h].astype(cd),
                            (((1,), (1,)), ((), ())),
                            preferred_element_type=jnp.float32)          # (TQ, S)
        s = s - jnp.max(s, axis=-1, keepdims=True)
        p = jnp.exp(s)
        p = p * pl.reciprocal(jnp.sum(p, axis=-1, keepdims=True),
                              approx=approx_softmax)
        attn_h = jnp.dot(p.astype(cd), v_cache[h].astype(cd),
                         preferred_element_type=jnp.float32)              # (TQ, Dh)
        return acc + jnp.dot(attn_h.astype(cd), wo_ref[h].astype(cd),
                             preferred_element_type=jnp.float32)          # (TQ, E)

    acc0 = jnp.zeros((tq, E), jnp.float32)
    attn = lax.fori_loop(0, n_head, head_body, acc0) + bo_ref[...]

    # ---- residual + LayerNorm 1 (f32 statistics) ----
    x1 = xq + attn
    mu1 = jnp.mean(x1, axis=-1, keepdims=True)
    var1 = jnp.mean((x1 - mu1) ** 2, axis=-1, keepdims=True)
    x1 = (x1 - mu1) * lax.rsqrt(var1 + eps) * ln1w_ref[...] + ln1b_ref[...]

    # ---- feed-forward: Linear(E, 4E) -> ReLU -> Linear(4E, E) ----
    h1 = jnp.dot(x1.astype(cd), w1_ref[...].astype(cd),
                 preferred_element_type=jnp.float32) + b1_ref[...]
    h1 = jnp.maximum(h1, 0.0)
    ff = jnp.dot(h1.astype(cd), w2_ref[...].astype(cd),
                 preferred_element_type=jnp.float32) + b2_ref[...]

    # ---- residual + LayerNorm 2 ----
    x2 = x1 + ff
    mu2 = jnp.mean(x2, axis=-1, keepdims=True)
    var2 = jnp.mean((x2 - mu2) ** 2, axis=-1, keepdims=True)
    x2 = (x2 - mu2) * lax.rsqrt(var2 + eps) * ln2w_ref[...] + ln2b_ref[...]

    o_ref[0] = x2.astype(o_ref.dtype)


# ---------------------------------------------------------------------------
# Wrapper: weight re-layout, BlockSpecs, grid over (batch, q-tiles).
# ---------------------------------------------------------------------------
def transformer_block(x, params, *, n_head, eps=1e-5, tq=None,
                      compute_dtype=jnp.float32, param_dtype=None,
                      approx_softmax=True, vmem_limit_bytes=None):
    B, S, E = x.shape
    assert E % n_head == 0
    Dh = E // n_head
    F = 4 * E

    # --- chip-aware defaults (safe fallbacks if detection fails) ---
    kind = ""
    try:
        kind = jax.devices()[0].device_kind.lower()
    except Exception:
        pass
    is_v7 = ("v7" in kind) or ("7x" in kind)
    if vmem_limit_bytes is None:
        if ("v2" in kind) or ("v3" in kind):
            vmem_limit_bytes = None                  # small-VMEM parts: use default
        elif is_v7:
            vmem_limit_bytes = 56 * 1024 * 1024      # 64 MiB physical, leave headroom
        else:
            vmem_limit_bytes = 100 * 1024 * 1024     # v4/v5e/v6e: 128 MiB physical

    # Query-tile size: bound live activations; keep (8,128) layout legality.
    if tq is None:
        cands = (256, 128) if (is_v7 and S >= 2048) else (512, 256, 128)
        tq = S
        for c in cands:
            if S % c == 0:
                tq = c
                break
    assert S % tq == 0, "tq must divide S"

    # --- per-head layouts; fuse K/V; fold 1/sqrt(Dh) into the Q projection ---
    scale = 1.0 / math.sqrt(Dh)
    per_head = lambda w: w.reshape(E, n_head, Dh).transpose(1, 0, 2)     # (H, E, Dh)
    wq = per_head(params["wq"]) * scale
    bq = params["bq"].reshape(n_head, 1, Dh) * scale
    wkv = jnp.concatenate([per_head(params["wk"]), per_head(params["wv"])],
                          axis=-1)                                        # (H, E, 2Dh)
    bkv = jnp.concatenate([params["bk"].reshape(n_head, 1, Dh),
                           params["bv"].reshape(n_head, 1, Dh)], axis=-1)  # (H, 1, 2Dh)
    wo = params["wo"].reshape(n_head, Dh, E)                              # (H, Dh, E)
    w1, w2 = params["w1"], params["w2"]

    if param_dtype is not None:  # e.g. bf16 on v6e/v7x: halves weight DMA + VMEM
        wq, wkv, wo = (t.astype(param_dtype) for t in (wq, wkv, wo))
        w1, w2 = w1.astype(param_dtype), w2.astype(param_dtype)

    def wspec(shape):  # resident weight/bias: constant index_map, single-buffered
        return pl.BlockSpec(shape, lambda b, q: (0,) * len(shape),
                            pipeline_mode=pl.Buffered(1))

    in_specs = [
        # full sequence: block index changes only at batch boundaries
        pl.BlockSpec((1, S, E), lambda b, q: (b, 0, 0),
                     pipeline_mode=pl.Buffered(1)),
        wspec((n_head, E, Dh)),  wspec((n_head, 1, Dh)),       # wq, bq
        wspec((n_head, E, 2 * Dh)), wspec((n_head, 1, 2 * Dh)),  # wkv, bkv
        wspec((n_head, Dh, E)),  wspec((1, E)),                # wo, bo
        wspec((1, E)), wspec((1, E)),                          # ln1 w, b
        wspec((E, F)), wspec((1, F)),                          # ffn w1, b1
        wspec((F, E)), wspec((1, E)),                          # ffn w2, b2
        wspec((1, E)), wspec((1, E)),                          # ln2 w, b
    ]

    # Advisory cost estimate for XLA's scheduler.
    flops = int(B * S * (24 * E * E + 4 * S * E))
    transcendentals = int(B * n_head * S * S + 4 * B * S)
    bytes_accessed = int(4 * (2 * B * S * E + 12 * E * E + 10 * E + 2 * F))
    ce = pl.CostEstimate(flops=flops, transcendentals=transcendentals,
                         bytes_accessed=bytes_accessed)

    kernel = functools.partial(_block_kernel, n_head=n_head, head_dim=Dh,
                               tq=tq, eps=eps, compute_dtype=compute_dtype,
                               approx_softmax=approx_softmax)

    return pl.pallas_call(
        kernel,
        out_shape=jax.ShapeDtypeStruct((B, S, E), x.dtype),
        grid=(B, S // tq),
        in_specs=in_specs,
        out_specs=pl.BlockSpec((1, tq, E), lambda b, q: (b, q, 0)),
        scratch_shapes=[pltpu.VMEM((n_head, S, Dh), compute_dtype),   # K cache
                        pltpu.VMEM((n_head, S, Dh), compute_dtype)],  # V cache
        compiler_params=pltpu.CompilerParams(
            # K/V cache is reused across q-tiles of a batch -> q axis arbitrary.
            dimension_semantics=("parallel", "arbitrary"),
            vmem_limit_bytes=vmem_limit_bytes),
        cost_estimate=ce,
    )(x,
      wq, bq, wkv, bkv, wo, params["bo"],
      params["ln1_w"], params["ln1_b"],
      w1, params["b1"], w2, params["b2"],
      params["ln2_w"], params["ln2_b"])


# ---------------------------------------------------------------------------
# Pure-JAX reference (mirrors PyTorch Block.forward semantics).
# ---------------------------------------------------------------------------
def reference_block(x, p, *, n_head, eps=1e-5):
    B, S, E = x.shape
    Dh = E // n_head

    def ln(z, w, b):
        mu = jnp.mean(z, -1, keepdims=True)
        var = jnp.mean((z - mu) ** 2, -1, keepdims=True)
        return (z - mu) * lax.rsqrt(var + eps) * w + b

    q = x @ p["wq"] + p["bq"]
    k = x @ p["wk"] + p["bk"]
    v = x @ p["wv"] + p["bv"]
    q = q.reshape(B, S, n_head, Dh).transpose(0, 2, 1, 3)
    k = k.reshape(B, S, n_head, Dh).transpose(0, 2, 1, 3)
    v = v.reshape(B, S, n_head, Dh).transpose(0, 2, 1, 3)
    s = jnp.einsum("bhqd,bhkd->bhqk", q, k) / math.sqrt(Dh)
    a = jax.nn.softmax(s, axis=-1)
    o = jnp.einsum("bhqk,bhkd->bhqd", a, v).transpose(0, 2, 1, 3).reshape(B, S, E)
    o = o @ p["wo"] + p["bo"]
    x = ln(x + o, p["ln1_w"], p["ln1_b"])
    ff = jnp.maximum(x @ p["w1"] + p["b1"], 0.0) @ p["w2"] + p["b2"]
    x = ln(x + ff, p["ln2_w"], p["ln2_b"])
    return x


# ---------------------------------------------------------------------------
def init_params(key, n_embd):
    E, F = n_embd, 4 * n_embd
    ks = jax.random.split(key, 12)
    n = lambda k, shape, scale: (scale * jax.random.normal(k, shape)).astype(jnp.float32)
    return {
        # attention in-projection (stored pre-transposed: x @ W)
        "wq": n(ks[0], (E, E), 0.1), "wk": n(ks[1], (E, E), 0.1), "wv": n(ks[2], (E, E), 0.1),
        "bq": n(ks[3], (1, E), 0.1), "bk": n(ks[4], (1, E), 0.1), "bv": n(ks[5], (1, E), 0.1),
        # attention out-projection
        "wo": n(ks[6], (E, E), 0.1), "bo": n(ks[7], (1, E), 0.1),
        # layernorm 1
        "ln1_w": jnp.ones((1, E), jnp.float32), "ln1_b": jnp.zeros((1, E), jnp.float32),
        # feed-forward
        "w1": n(ks[8], (E, F), 0.1), "b1": n(ks[9], (1, F), 0.1),
        "w2": n(ks[10], (F, E), 0.1), "b2": n(ks[11], (1, E), 0.1),
        # layernorm 2
        "ln2_w": jnp.ones((1, E), jnp.float32), "ln2_b": jnp.zeros((1, E), jnp.float32),
    }


if __name__ == "__main__":
    B, S, E, H = 2, 8, 32, 4           # batch, seq, n_embd, n_head

    key = jax.random.PRNGKey(0)
    kx, kp = jax.random.split(key)
    x = jax.random.normal(kx, (B, S, E), dtype=jnp.float32)
    params = init_params(kp, E)

    # f32 compute for the strict check; in production on v6e/v7x pass
    # compute_dtype=jnp.bfloat16 / param_dtype=jnp.bfloat16.
    out = transformer_block(x, params, n_head=H)
    out = jax.block_until_ready(out)

    ref = reference_block(x, params, n_head=H)
    assert out.shape == (B, S, E)
    # approx reciprocal in the softmax denominator -> slightly looser tolerance
    assert jnp.allclose(out, ref, rtol=2e-3, atol=2e-3), "mismatch vs reference"

    print("KERNEL_OK")
</pallas_src>

<mosaic_0001>
module attributes {stable_mosaic.version = 11 : i64} {
  func.func @_block_kernel(%arg0: i32, %arg1: i32, %arg2: memref<1x8x32xf32, #tpu.memory_space<vmem>>, %arg3: memref<4x32x8xf32, #tpu.memory_space<vmem>>, %arg4: memref<4x1x8xf32, #tpu.memory_space<vmem>>, %arg5: memref<4x32x16xf32, #tpu.memory_space<vmem>>, %arg6: memref<4x1x16xf32, #tpu.memory_space<vmem>>, %arg7: memref<4x8x32xf32, #tpu.memory_space<vmem>>, %arg8: memref<1x32xf32, #tpu.memory_space<vmem>>, %arg9: memref<1x32xf32, #tpu.memory_space<vmem>>, %arg10: memref<1x32xf32, #tpu.memory_space<vmem>>, %arg11: memref<32x128xf32, #tpu.memory_space<vmem>>, %arg12: memref<1x128xf32, #tpu.memory_space<vmem>>, %arg13: memref<128x32xf32, #tpu.memory_space<vmem>>, %arg14: memref<1x32xf32, #tpu.memory_space<vmem>>, %arg15: memref<1x32xf32, #tpu.memory_space<vmem>>, %arg16: memref<1x32xf32, #tpu.memory_space<vmem>>, %arg17: memref<1x8x32xf32, #tpu.memory_space<vmem>>, %arg18: memref<4x8x8xf32, #tpu.memory_space<vmem>>, %arg19: memref<4x8x8xf32, #tpu.memory_space<vmem>>) attributes {dimension_semantics = [#tpu.dimension_semantics<parallel>, #tpu.dimension_semantics<arbitrary>], iteration_bounds = array<i64: 2, 1>, scalar_prefetch = 0 : i64, scratch_operands = 2 : i64, tpu.core_type = #tpu.core_type<tc>, window_params = [{pipeline_mode = #tpu.pipeline_mode<synchronous>, transform_indices = @transform_0, window_bounds = array<i64: 1, 8, 32>}, {pipeline_mode = #tpu.pipeline_mode<synchronous>, transform_indices = @transform_1, window_bounds = array<i64: 4, 32, 8>}, {pipeline_mode = #tpu.pipeline_mode<synchronous>, transform_indices = @transform_2, window_bounds = array<i64: 4, 1, 8>}, {pipeline_mode = #tpu.pipeline_mode<synchronous>, transform_indices = @transform_3, window_bounds = array<i64: 4, 32, 16>}, {pipeline_mode = #tpu.pipeline_mode<synchronous>, transform_indices = @transform_4, window_bounds = array<i64: 4, 1, 16>}, {pipeline_mode = #tpu.pipeline_mode<synchronous>, transform_indices = @transform_5, window_bounds = array<i64: 4, 8, 32>}, {pipeline_mode = #tpu.pipeline_mode<synchronous>, transform_indices = @transform_6, window_bounds = array<i64: 1, 32>}, {pipeline_mode = #tpu.pipeline_mode<synchronous>, transform_indices = @transform_7, window_bounds = array<i64: 1, 32>}, {pipeline_mode = #tpu.pipeline_mode<synchronous>, transform_indices = @transform_8, window_bounds = array<i64: 1, 32>}, {pipeline_mode = #tpu.pipeline_mode<synchronous>, transform_indices = @transform_9, window_bounds = array<i64: 32, 128>}, {pipeline_mode = #tpu.pipeline_mode<synchronous>, transform_indices = @transform_10, window_bounds = array<i64: 1, 128>}, {pipeline_mode = #tpu.pipeline_mode<synchronous>, transform_indices = @transform_11, window_bounds = array<i64: 128, 32>}, {pipeline_mode = #tpu.pipeline_mode<synchronous>, transform_indices = @transform_12, window_bounds = array<i64: 1, 32>}, {pipeline_mode = #tpu.pipeline_mode<synchronous>, transform_indices = @transform_13, window_bounds = array<i64: 1, 32>}, {pipeline_mode = #tpu.pipeline_mode<synchronous>, transform_indices = @transform_14, window_bounds = array<i64: 1, 32>}, {transform_indices = @transform_15, window_bounds = array<i64: 1, 8, 32>}]} {
    %c0_i32 = arith.constant 0 : i32
    %0 = arith.cmpi eq, %arg1, %c0_i32 : i32
    %1 = arith.extui %0 : i1 to i32
    %c0_i32_0 = arith.constant 0 : i32
    %2 = arith.cmpi ne, %1, %c0_i32_0 : i32
    scf.if %2 {
      %c0_38 = arith.constant 0 : index
      %c0_39 = arith.constant 0 : index
      %c0_40 = arith.constant 0 : index
      %79 = vector.load %arg2[%c0_38, %c0_39, %c0_40] : memref<1x8x32xf32, #tpu.memory_space<vmem>>, vector<1x8x32xf32>
      %80 = vector.shape_cast %79 : vector<1x8x32xf32> to vector<8x32xf32>
      %c0_i32_41 = arith.constant 0 : i32
      %c4_i32_42 = arith.constant 4 : i32
      %81 = arith.addi %c0_i32_41, %c4_i32_42 : i32
      %c1_i32_43 = arith.constant 1 : i32
      scf.for %arg20 = %c0_i32_41 to %81 step %c1_i32_43  : i32 {
        %c1_i32_45 = arith.constant 1 : i32
        %82 = arith.muli %arg20, %c1_i32_45 : i32
        %c0_i32_46 = arith.constant 0 : i32
        %83 = arith.addi %c0_i32_46, %82 : i32
        %84 = arith.index_cast %83 : i32 to index
        %c0_47 = arith.constant 0 : index
        %c0_48 = arith.constant 0 : index
        %85 = vector.load %arg5[%84, %c0_47, %c0_48] : memref<4x32x16xf32, #tpu.memory_space<vmem>>, vector<1x32x16xf32>
        %86 = vector.shape_cast %85 : vector<1x32x16xf32> to vector<32x16xf32>
        %cst_49 = arith.constant dense<0.000000e+00> : vector<8x16xf32>
        %87 = tpu.matmul %80, %86, %cst_49 {dimension_numbers = #tpu.dot_dimension_numbers<[1], [0], [0], [1], [0, 0, 1, 1], [], []>} : vector<8x32xf32>, vector<32x16xf32>, vector<8x16xf32> -> vector<8x16xf32>
        %88 = arith.index_cast %83 : i32 to index
        %c0_50 = arith.constant 0 : index
        %c0_51 = arith.constant 0 : index
        %89 = vector.load %arg6[%88, %c0_50, %c0_51] : memref<4x1x16xf32, #tpu.memory_space<vmem>>, vector<1x1x16xf32>
        %90 = vector.shape_cast %89 : vector<1x1x16xf32> to vector<1x16xf32>
        %91 = vector.broadcast %90 : vector<1x16xf32> to vector<8x16xf32>
        %92 = arith.addf %87, %91 : vector<8x16xf32>
        %93 = vector.extract_strided_slice %92 {offsets = [0, 0], sizes = [8, 8], strides = [1, 1]} : vector<8x16xf32> to vector<8x8xf32>
        %94 = arith.index_cast %83 : i32 to index
        %c0_52 = arith.constant 0 : index
        %c0_53 = arith.constant 0 : index
        %95 = vector.load %arg18[%94, %c0_52, %c0_53] : memref<4x8x8xf32, #tpu.memory_space<vmem>>, vector<1x8x8xf32>
        %96 = vector.shape_cast %95 : vector<1x8x8xf32> to vector<8x8xf32>
        %97 = vector.shape_cast %93 : vector<8x8xf32> to vector<1x8x8xf32>
        tpu.vector_store %arg18[%94, %c0_52, %c0_53], %97 {strides = array<i32>} : memref<4x8x8xf32, #tpu.memory_space<vmem>>, vector<1x8x8xf32>,
        %98 = vector.extract_strided_slice %92 {offsets = [0, 8], sizes = [8, 8], strides = [1, 1]} : vector<8x16xf32> to vector<8x8xf32>
        %99 = arith.index_cast %83 : i32 to index
        %c0_54 = arith.constant 0 : index
        %c0_55 = arith.constant 0 : index
        %100 = vector.load %arg19[%99, %c0_54, %c0_55] : memref<4x8x8xf32, #tpu.memory_space<vmem>>, vector<1x8x8xf32>
        %101 = vector.shape_cast %100 : vector<1x8x8xf32> to vector<8x8xf32>
        %102 = vector.shape_cast %98 : vector<8x8xf32> to vector<1x8x8xf32>
        tpu.vector_store %arg19[%99, %c0_54, %c0_55], %102 {strides = array<i32>} : memref<4x8x8xf32, #tpu.memory_space<vmem>>, vector<1x8x8xf32>,
      }
      %c4_i32_44 = arith.constant 4 : i32
    } else {
    }
    %c8_i32 = arith.constant 8 : i32
    %3 = arith.muli %arg1, %c8_i32 : i32
    %4 = tpu.assume_multiple %3, 8 : i32
    %c0 = arith.constant 0 : index
    %5 = arith.index_cast %4 : i32 to index
    %c0_1 = arith.constant 0 : index
    %6 = vector.load %arg2[%c0, %5, %c0_1] : memref<1x8x32xf32, #tpu.memory_space<vmem>>, vector<1x8x32xf32>
    %7 = vector.shape_cast %6 : vector<1x8x32xf32> to vector<8x32xf32>
    %cst = arith.constant 0.000000e+00 : f32
    %8 = vector.broadcast %cst : f32 to vector<8x32xf32>
    %c0_i32_2 = arith.constant 0 : i32
    %c4_i32 = arith.constant 4 : i32
    %9 = arith.addi %c0_i32_2, %c4_i32 : i32
    %c1_i32 = arith.constant 1 : i32
    %10 = scf.for %arg20 = %c0_i32_2 to %9 step %c1_i32 iter_args(%arg21 = %8) -> (vector<8x32xf32>)  : i32 {
      %79 = arith.index_cast %arg20 : i32 to index
      %c0_38 = arith.constant 0 : index
      %c0_39 = arith.constant 0 : index
      %80 = vector.load %arg3[%79, %c0_38, %c0_39] : memref<4x32x8xf32, #tpu.memory_space<vmem>>, vector<1x32x8xf32>
      %81 = vector.shape_cast %80 : vector<1x32x8xf32> to vector<32x8xf32>
      %cst_40 = arith.constant dense<0.000000e+00> : vector<8x8xf32>
      %82 = tpu.matmul %7, %81, %cst_40 {dimension_numbers = #tpu.dot_dimension_numbers<[1], [0], [0], [1], [0, 0, 1, 1], [], []>} : vector<8x32xf32>, vector<32x8xf32>, vector<8x8xf32> -> vector<8x8xf32>
      %83 = arith.index_cast %arg20 : i32 to index
      %c0_41 = arith.constant 0 : index
      %c0_42 = arith.constant 0 : index
      %84 = vector.load %arg4[%83, %c0_41, %c0_42] : memref<4x1x8xf32, #tpu.memory_space<vmem>>, vector<1x1x8xf32>
      %85 = vector.shape_cast %84 : vector<1x1x8xf32> to vector<1x8xf32>
      %86 = vector.broadcast %85 : vector<1x8xf32> to vector<8x8xf32>
      %87 = arith.addf %82, %86 : vector<8x8xf32>
      %88 = arith.index_cast %arg20 : i32 to index
      %c0_43 = arith.constant 0 : index
      %c0_44 = arith.constant 0 : index
      %89 = vector.load %arg18[%88, %c0_43, %c0_44] : memref<4x8x8xf32, #tpu.memory_space<vmem>>, vector<1x8x8xf32>
      %90 = vector.shape_cast %89 : vector<1x8x8xf32> to vector<8x8xf32>
      %cst_45 = arith.constant dense<0.000000e+00> : vector<8x8xf32>
      %91 = tpu.matmul %87, %90, %cst_45 {dimension_numbers = #tpu.dot_dimension_numbers<[1], [1], [0], [0], [0, 0, 1, 0], [], []>} : vector<8x8xf32>, vector<8x8xf32>, vector<8x8xf32> -> vector<8x8xf32>
      %cst_46 = arith.constant dense<0xFF800000> : vector<8xf32>
      %92 = vector.multi_reduction <maximumf>, %91, %cst_46 [1] : vector<8x8xf32> to vector<8xf32>
      %93 = vector.shape_cast %92 : vector<8xf32> to vector<8x1xf32>
      %94 = vector.broadcast %93 : vector<8x1xf32> to vector<8x8xf32>
      %95 = arith.subf %91, %94 : vector<8x8xf32>
      %96 = math.exp %95 : vector<8x8xf32>
      %cst_47 = arith.constant dense<0.000000e+00> : vector<8xf32>
      %97 = vector.multi_reduction <add>, %96, %cst_47 [1] : vector<8x8xf32> to vector<8xf32>
      %98 = vector.shape_cast %97 : vector<8xf32> to vector<8x1xf32>
      %99 = tpu.reciprocal %98 {approx = true} : vector<8x1xf32> -> vector<8x1xf32>
      %100 = vector.broadcast %99 : vector<8x1xf32> to vector<8x8xf32>
      %101 = arith.mulf %96, %100 : vector<8x8xf32>
      %102 = arith.index_cast %arg20 : i32 to index
      %c0_48 = arith.constant 0 : index
      %c0_49 = arith.constant 0 : index
      %103 = vector.load %arg19[%102, %c0_48, %c0_49] : memref<4x8x8xf32, #tpu.memory_space<vmem>>, vector<1x8x8xf32>
      %104 = vector.shape_cast %103 : vector<1x8x8xf32> to vector<8x8xf32>
      %cst_50 = arith.constant dense<0.000000e+00> : vector<8x8xf32>
      %105 = tpu.matmul %101, %104, %cst_50 {dimension_numbers = #tpu.dot_dimension_numbers<[1], [0], [0], [1], [0, 0, 1, 1], [], []>} : vector<8x8xf32>, vector<8x8xf32>, vector<8x8xf32> -> vector<8x8xf32>
      %106 = arith.index_cast %arg20 : i32 to index
      %c0_51 = arith.constant 0 : index
      %c0_52 = arith.constant 0 : index
      %107 = vector.load %arg7[%106, %c0_51, %c0_52] : memref<4x8x32xf32, #tpu.memory_space<vmem>>, vector<1x8x32xf32>
      %108 = vector.shape_cast %107 : vector<1x8x32xf32> to vector<8x32xf32>
      %cst_53 = arith.constant dense<0.000000e+00> : vector<8x32xf32>
      %109 = tpu.matmul %105, %108, %cst_53 {dimension_numbers = #tpu.dot_dimension_numbers<[1], [0], [0], [1], [0, 0, 1, 1], [], []>} : vector<8x8xf32>, vector<8x32xf32>, vector<8x32xf32> -> vector<8x32xf32>
      %110 = arith.addf %arg21, %109 : vector<8x32xf32>
      scf.yield %110 : vector<8x32xf32>
    }
    %c4_i32_3 = arith.constant 4 : i32
    %c0_4 = arith.constant 0 : index
    %c0_5 = arith.constant 0 : index
    %11 = vector.load %arg8[%c0_4, %c0_5] : memref<1x32xf32, #tpu.memory_space<vmem>>, vector<1x32xf32>
    %12 = vector.broadcast %11 : vector<1x32xf32> to vector<8x32xf32>
    %13 = arith.addf %10, %12 : vector<8x32xf32>
    %14 = arith.addf %7, %13 : vector<8x32xf32>
    %cst_6 = arith.constant dense<0.000000e+00> : vector<8xf32>
    %15 = vector.multi_reduction <add>, %14, %cst_6 [1] : vector<8x32xf32> to vector<8xf32>
    %16 = vector.shape_cast %15 : vector<8xf32> to vector<8x1xf32>
    %cst_7 = arith.constant 3.200000e+01 : f32
    %17 = vector.broadcast %cst_7 : f32 to vector<8x1xf32>
    %18 = arith.divf %16, %17 : vector<8x1xf32>
    %19 = vector.broadcast %18 : vector<8x1xf32> to vector<8x32xf32>
    %20 = arith.subf %14, %19 : vector<8x32xf32>
    %21 = arith.mulf %20, %20 : vector<8x32xf32>
    %cst_8 = arith.constant dense<0.000000e+00> : vector<8xf32>
    %22 = vector.multi_reduction <add>, %21, %cst_8 [1] : vector<8x32xf32> to vector<8xf32>
    %23 = vector.shape_cast %22 : vector<8xf32> to vector<8x1xf32>
    %cst_9 = arith.constant 3.200000e+01 : f32
    %24 = vector.broadcast %cst_9 : f32 to vector<8x1xf32>
    %25 = arith.divf %23, %24 : vector<8x1xf32>
    %26 = vector.broadcast %18 : vector<8x1xf32> to vector<8x32xf32>
    %27 = arith.subf %14, %26 : vector<8x32xf32>
    %cst_10 = arith.constant 9.99999974E-6 : f32
    %28 = vector.broadcast %cst_10 : f32 to vector<8x1xf32>
    %29 = arith.addf %25, %28 : vector<8x1xf32>
    %30 = math.rsqrt %29 : vector<8x1xf32>
    %31 = vector.broadcast %30 : vector<8x1xf32> to vector<8x32xf32>
    %32 = arith.mulf %27, %31 : vector<8x32xf32>
    %c0_11 = arith.constant 0 : index
    %c0_12 = arith.constant 0 : index
    %33 = vector.load %arg9[%c0_11, %c0_12] : memref<1x32xf32, #tpu.memory_space<vmem>>, vector<1x32xf32>
    %34 = vector.broadcast %33 : vector<1x32xf32> to vector<8x32xf32>
    %35 = arith.mulf %32, %34 : vector<8x32xf32>
    %c0_13 = arith.constant 0 : index
    %c0_14 = arith.constant 0 : index
    %36 = vector.load %arg10[%c0_13, %c0_14] : memref<1x32xf32, #tpu.memory_space<vmem>>, vector<1x32xf32>
    %37 = vector.broadcast %36 : vector<1x32xf32> to vector<8x32xf32>
    %38 = arith.addf %35, %37 : vector<8x32xf32>
    %c0_15 = arith.constant 0 : index
    %c0_16 = arith.constant 0 : index
    %39 = vector.load %arg11[%c0_15, %c0_16] : memref<32x128xf32, #tpu.memory_space<vmem>>, vector<32x128xf32>
    %cst_17 = arith.constant dense<0.000000e+00> : vector<8x128xf32>
    %40 = tpu.matmul %38, %39, %cst_17 {dimension_numbers = #tpu.dot_dimension_numbers<[1], [0], [0], [1], [0, 0, 1, 1], [], []>} : vector<8x32xf32>, vector<32x128xf32>, vector<8x128xf32> -> vector<8x128xf32>
    %c0_18 = arith.constant 0 : index
    %c0_19 = arith.constant 0 : index
    %41 = vector.load %arg12[%c0_18, %c0_19] : memref<1x128xf32, #tpu.memory_space<vmem>>, vector<1x128xf32>
    %42 = vector.broadcast %41 : vector<1x128xf32> to vector<8x128xf32>
    %43 = arith.addf %40, %42 : vector<8x128xf32>
    %cst_20 = arith.constant 0.000000e+00 : f32
    %44 = vector.broadcast %cst_20 : f32 to vector<8x128xf32>
    %45 = arith.maximumf %43, %44 : vector<8x128xf32>
    %c0_21 = arith.constant 0 : index
    %c0_22 = arith.constant 0 : index
    %46 = vector.load %arg13[%c0_21, %c0_22] : memref<128x32xf32, #tpu.memory_space<vmem>>, vector<128x32xf32>
    %cst_23 = arith.constant dense<0.000000e+00> : vector<8x32xf32>
    %47 = tpu.matmul %45, %46, %cst_23 {dimension_numbers = #tpu.dot_dimension_numbers<[1], [0], [0], [1], [0, 0, 1, 1], [], []>} : vector<8x128xf32>, vector<128x32xf32>, vector<8x32xf32> -> vector<8x32xf32>
    %c0_24 = arith.constant 0 : index
    %c0_25 = arith.constant 0 : index
    %48 = vector.load %arg14[%c0_24, %c0_25] : memref<1x32xf32, #tpu.memory_space<vmem>>, vector<1x32xf32>
    %49 = vector.broadcast %48 : vector<1x32xf32> to vector<8x32xf32>
    %50 = arith.addf %47, %49 : vector<8x32xf32>
    %51 = arith.addf %38, %50 : vector<8x32xf32>
    %cst_26 = arith.constant dense<0.000000e+00> : vector<8xf32>
    %52 = vector.multi_reduction <add>, %51, %cst_26 [1] : vector<8x32xf32> to vector<8xf32>
    %53 = vector.shape_cast %52 : vector<8xf32> to vector<8x1xf32>
    %cst_27 = arith.constant 3.200000e+01 : f32
    %54 = vector.broadcast %cst_27 : f32 to vector<8x1xf32>
    %55 = arith.divf %53, %54 : vector<8x1xf32>
    %56 = vector.broadcast %55 : vector<8x1xf32> to vector<8x32xf32>
    %57 = arith.subf %51, %56 : vector<8x32xf32>
    %58 = arith.mulf %57, %57 : vector<8x32xf32>
    %cst_28 = arith.constant dense<0.000000e+00> : vector<8xf32>
    %59 = vector.multi_reduction <add>, %58, %cst_28 [1] : vector<8x32xf32> to vector<8xf32>
    %60 = vector.shape_cast %59 : vector<8xf32> to vector<8x1xf32>
    %cst_29 = arith.constant 3.200000e+01 : f32
    %61 = vector.broadcast %cst_29 : f32 to vector<8x1xf32>
    %62 = arith.divf %60, %61 : vector<8x1xf32>
    %63 = vector.broadcast %55 : vector<8x1xf32> to vector<8x32xf32>
    %64 = arith.subf %51, %63 : vector<8x32xf32>
    %cst_30 = arith.constant 9.99999974E-6 : f32
    %65 = vector.broadcast %cst_30 : f32 to vector<8x1xf32>
    %66 = arith.addf %62, %65 : vector<8x1xf32>
    %67 = math.rsqrt %66 : vector<8x1xf32>
    %68 = vector.broadcast %67 : vector<8x1xf32> to vector<8x32xf32>
    %69 = arith.mulf %64, %68 : vector<8x32xf32>
    %c0_31 = arith.constant 0 : index
    %c0_32 = arith.constant 0 : index
    %70 = vector.load %arg15[%c0_31, %c0_32] : memref<1x32xf32, #tpu.memory_space<vmem>>, vector<1x32xf32>
    %71 = vector.broadcast %70 : vector<1x32xf32> to vector<8x32xf32>
    %72 = arith.mulf %69, %71 : vector<8x32xf32>
    %c0_33 = arith.constant 0 : index
    %c0_34 = arith.constant 0 : index
    %73 = vector.load %arg16[%c0_33, %c0_34] : memref<1x32xf32, #tpu.memory_space<vmem>>, vector<1x32xf32>
    %74 = vector.broadcast %73 : vector<1x32xf32> to vector<8x32xf32>
    %75 = arith.addf %72, %74 : vector<8x32xf32>
    %c0_35 = arith.constant 0 : index
    %c0_36 = arith.constant 0 : index
    %c0_37 = arith.constant 0 : index
    %76 = vector.load %arg17[%c0_35, %c0_36, %c0_37] : memref<1x8x32xf32, #tpu.memory_space<vmem>>, vector<1x8x32xf32>
    %77 = vector.shape_cast %76 : vector<1x8x32xf32> to vector<8x32xf32>
    %78 = vector.shape_cast %75 : vector<8x32xf32> to vector<1x8x32xf32>
    tpu.vector_store %arg17[%c0_35, %c0_36, %c0_37], %78 {strides = array<i32>} : memref<1x8x32xf32, #tpu.memory_space<vmem>>, vector<1x8x32xf32>,
    return
  }
  func.func @transform_0(%arg0: i32, %arg1: i32) -> (i32, i32, i32) {
    %c0_i32 = arith.constant 0 : i32
    %c0_i32_0 = arith.constant 0 : i32
    %c0_i32_1 = arith.constant 0 : i32
    return %arg0, %c0_i32, %c0_i32_0 : i32, i32, i32
  }
  func.func @transform_1(%arg0: i32, %arg1: i32) -> (i32, i32, i32) {
    %c0_i32 = arith.constant 0 : i32
    %c0_i32_0 = arith.constant 0 : i32
    %c0_i32_1 = arith.constant 0 : i32
    %c0_i32_2 = arith.constant 0 : i32
    return %c0_i32, %c0_i32_0, %c0_i32_1 : i32, i32, i32
  }
  func.func @transform_2(%arg0: i32, %arg1: i32) -> (i32, i32, i32) {
    %c0_i32 = arith.constant 0 : i32
    %c0_i32_0 = arith.constant 0 : i32
    %c0_i32_1 = arith.constant 0 : i32
    %c0_i32_2 = arith.constant 0 : i32
    return %c0_i32, %c0_i32_0, %c0_i32_1 : i32, i32, i32
  }
  func.func @transform_3(%arg0: i32, %arg1: i32) -> (i32, i32, i32) {
    %c0_i32 = arith.constant 0 : i32
    %c0_i32_0 = arith.constant 0 : i32
    %c0_i32_1 = arith.constant 0 : i32
    %c0_i32_2 = arith.constant 0 : i32
    return %c0_i32, %c0_i32_0, %c0_i32_1 : i32, i32, i32
  }
  func.func @transform_4(%arg0: i32, %arg1: i32) -> (i32, i32, i32) {
    %c0_i32 = arith.constant 0 : i32
    %c0_i32_0 = arith.constant 0 : i32
    %c0_i32_1 = arith.constant 0 : i32
    %c0_i32_2 = arith.constant 0 : i32
    return %c0_i32, %c0_i32_0, %c0_i32_1 : i32, i32, i32
  }
  func.func @transform_5(%arg0: i32, %arg1: i32) -> (i32, i32, i32) {
    %c0_i32 = arith.constant 0 : i32
    %c0_i32_0 = arith.constant 0 : i32
    %c0_i32_1 = arith.constant 0 : i32
    %c0_i32_2 = arith.constant 0 : i32
    return %c0_i32, %c0_i32_0, %c0_i32_1 : i32, i32, i32
  }
  func.func @transform_6(%arg0: i32, %arg1: i32) -> (i32, i32) {
    %c0_i32 = arith.constant 0 : i32
    %c0_i32_0 = arith.constant 0 : i32
    %c0_i32_1 = arith.constant 0 : i32
    return %c0_i32, %c0_i32_0 : i32, i32
  }
  func.func @transform_7(%arg0: i32, %arg1: i32) -> (i32, i32) {
    %c0_i32 = arith.constant 0 : i32
    %c0_i32_0 = arith.constant 0 : i32
    %c0_i32_1 = arith.constant 0 : i32
    return %c0_i32, %c0_i32_0 : i32, i32
  }
  func.func @transform_8(%arg0: i32, %arg1: i32) -> (i32, i32) {
    %c0_i32 = arith.constant 0 : i32
    %c0_i32_0 = arith.constant 0 : i32
    %c0_i32_1 = arith.constant 0 : i32
    return %c0_i32, %c0_i32_0 : i32, i32
  }
  func.func @transform_9(%arg0: i32, %arg1: i32) -> (i32, i32) {
    %c0_i32 = arith.constant 0 : i32
    %c0_i32_0 = arith.constant 0 : i32
    %c0_i32_1 = arith.constant 0 : i32
    return %c0_i32, %c0_i32_0 : i32, i32
  }
  func.func @transform_10(%arg0: i32, %arg1: i32) -> (i32, i32) {
    %c0_i32 = arith.constant 0 : i32
    %c0_i32_0 = arith.constant 0 : i32
    %c0_i32_1 = arith.constant 0 : i32
    return %c0_i32, %c0_i32_0 : i32, i32
  }
  func.func @transform_11(%arg0: i32, %arg1: i32) -> (i32, i32) {
    %c0_i32 = arith.constant 0 : i32
    %c0_i32_0 = arith.constant 0 : i32
    %c0_i32_1 = arith.constant 0 : i32
    return %c0_i32, %c0_i32_0 : i32, i32
  }
  func.func @transform_12(%arg0: i32, %arg1: i32) -> (i32, i32) {
    %c0_i32 = arith.constant 0 : i32
    %c0_i32_0 = arith.constant 0 : i32
    %c0_i32_1 = arith.constant 0 : i32
    return %c0_i32, %c0_i32_0 : i32, i32
  }
  func.func @transform_13(%arg0: i32, %arg1: i32) -> (i32, i32) {
    %c0_i32 = arith.constant 0 : i32
    %c0_i32_0 = arith.constant 0 : i32
    %c0_i32_1 = arith.constant 0 : i32
    return %c0_i32, %c0_i32_0 : i32, i32
  }
  func.func @transform_14(%arg0: i32, %arg1: i32) -> (i32, i32) {
    %c0_i32 = arith.constant 0 : i32
    %c0_i32_0 = arith.constant 0 : i32
    %c0_i32_1 = arith.constant 0 : i32
    return %c0_i32, %c0_i32_0 : i32, i32
  }
  func.func @transform_15(%arg0: i32, %arg1: i32) -> (i32, i32, i32) {
    %c0_i32 = arith.constant 0 : i32
    %c0_i32_0 = arith.constant 0 : i32
    return %arg0, %arg1, %c0_i32 : i32, i32, i32
  }
}

</mosaic_0001>

<llo_original>
// kernel: tpu_custom_call.1
$region0: #{tpu_custom_call.1}
  #allocation0 [shape = 'u32[]', space=smem, size = 0x4, offset = 0x4, fixed_abs, tag = 'smem constant byte address 0x4 - core index']
  #allocation1 [shape = 'u32[144,128]{1,0:T(1,128)}', space=vmem, size = 0x12000, scoped, tag = 'internal scratch']
  #allocation2 [shape = 'f32[4,8,8]{2,1,0:T(8,128)}', space=vmem, size = 0x4000, scoped, tag = 'scratch operand']
  #allocation3 [shape = 'f32[4,8,8]{2,1,0:T(8,128)}', space=vmem, size = 0x4000, scoped, tag = 'scratch operand']
  %s0 = inlined_call_operand.hbm [shape: f32[2,8,32], index: 0, kind: input, shape index: {}]
  %s1 = inlined_call_operand.hbm [shape: f32[4,32,8], index: 1, kind: input, shape index: {}]
  %s2 = inlined_call_operand.hbm [shape: f32[4,1,8], index: 2, kind: input, shape index: {}]
  %s3 = inlined_call_operand.hbm [shape: f32[4,32,16], index: 3, kind: input, shape index: {}]
  %s4 = inlined_call_operand.hbm [shape: f32[4,1,16], index: 4, kind: input, shape index: {}]
  %s5 = inlined_call_operand.hbm [shape: f32[4,8,32], index: 5, kind: input, shape index: {}]
  %s6 = inlined_call_operand.hbm [shape: f32[1,32], index: 6, kind: input, shape index: {}]
  %s7 = inlined_call_operand.hbm [shape: f32[1,32], index: 7, kind: input, shape index: {}]
  %s8 = inlined_call_operand.hbm [shape: f32[1,32], index: 8, kind: input, shape index: {}]
  %s9 = inlined_call_operand.hbm [shape: f32[32,128], index: 9, kind: input, shape index: {}]
  %s10 = inlined_call_operand.hbm [shape: f32[1,128], index: 10, kind: input, shape index: {}]
  %s11 = inlined_call_operand.hbm [shape: f32[128,32], index: 11, kind: input, shape index: {}]
  %s12 = inlined_call_operand.hbm [shape: f32[1,32], index: 12, kind: input, shape index: {}]
  %s13 = inlined_call_operand.hbm [shape: f32[1,32], index: 13, kind: input, shape index: {}]
  %s14 = inlined_call_operand.hbm [shape: f32[1,32], index: 14, kind: input, shape index: {}]
  %s15 = inlined_call_operand.hbm [shape: f32[2,8,32], index: 15, kind: output, shape index: {}]
  %s16 = sld [smem:[#allocation0]]
  $region171: #{tpu_custom_call.1} parent=0
    _
  %s18 = ssub.s32 1, %s16
  %s19 = scalar_select 0, %s18, %s16
  $region1: #{tpu_custom_call.1} parent=0
    #allocation4 [shape = 'u8[4096]{0}', space=vmem, size = 0x1000, scoped, tag = 'input window, operand 0, single buffered']
    #allocation5 [shape = 's32[2]{0}', space=sflag, size = 0x8, scoped, tag = 'scoped memory for tpu_custom_call.1']
    #allocation6 [shape = 's32[2]{0}', space=sflag, size = 0x8, scoped, tag = 'scoped memory for tpu_custom_call.1']
    #allocation7 [shape = 'u8[65536]{0}', space=vmem, size = 0x10000, scoped, tag = 'input window, operand 1, single buffered']
    #allocation8 [shape = 's32[1]{0}', space=sflag, size = 0x4, scoped, tag = 'scoped memory for tpu_custom_call.1']
    #allocation9 [shape = 'u8[2048]{0}', space=vmem, size = 0x800, scoped, tag = 'input window, operand 2, single buffered']
    #allocation10 [shape = 'u8[65536]{0}', space=vmem, size = 0x10000, scoped, tag = 'input window, operand 3, single buffered']
    #allocation11 [shape = 's32[1]{0}', space=sflag, size = 0x4, scoped, tag = 'scoped memory for tpu_custom_call.1']
    #allocation12 [shape = 'u8[2048]{0}', space=vmem, size = 0x800, scoped, tag = 'input window, operand 4, single buffered']
    #allocation13 [shape = 'u8[16384]{0}', space=vmem, size = 0x4000, scoped, tag = 'input window, operand 5, single buffered']
    #allocation14 [shape = 's32[1]{0}', space=sflag, size = 0x4, scoped, tag = 'scoped memory for tpu_custom_call.1']
    #allocation15 [shape = 'u8[512]{0}', space=vmem, size = 0x400, scoped, tag = 'input window, operand 6, single buffered']
    #allocation16 [shape = 'u8[512]{0}', space=vmem, size = 0x400, scoped, tag = 'input window, operand 7, single buffered']
    #allocation17 [shape = 's32[1]{0}', space=sflag, size = 0x4, scoped, tag = 'scoped memory for tpu_custom_call.1']
    #allocation18 [shape = 'u8[512]{0}', space=vmem, size = 0x400, scoped, tag = 'input window, operand 8, single buffered']
    #allocation19 [shape = 'u8[16384]{0}', space=vmem, size = 0x4000, scoped, tag = 'input window, operand 9, single buffered']
    #allocation20 [shape = 's32[1]{0}', space=sflag, size = 0x4, scoped, tag = 'scoped memory for tpu_custom_call.1']
    #allocation21 [shape = 'u8[512]{0}', space=vmem, size = 0x400, scoped, tag = 'input window, operand 10, single buffered']
    #allocation22 [shape = 'u8[65536]{0}', space=vmem, size = 0x10000, scoped, tag = 'input window, operand 11, single buffered']
    #allocation23 [shape = 's32[1]{0}', space=sflag, size = 0x4, scoped, tag = 'scoped memory for tpu_custom_call.1']
    #allocation24 [shape = 'u8[512]{0}', space=vmem, size = 0x400, scoped, tag = 'input window, operand 12, single buffered']
    #allocation25 [shape = 'u8[512]{0}', space=vmem, size = 0x400, scoped, tag = 'input window, operand 13, single buffered']
    #allocation26 [shape = 's32[1]{0}', space=sflag, size = 0x4, scoped, tag = 'scoped memory for tpu_custom_call.1']
    #allocation27 [shape = 'u8[512]{0}', space=vmem, size = 0x400, scoped, tag = 'input window, operand 14, single buffered']
    #allocation28 [shape = 'u8[8192]{0}', space=vmem, size = 0x2000, scoped, tag = 'output window, operand 0']
    %20 = vsyncpa [#allocation5], 0
    %21 = vsyncpa [#allocation8], 0
    %22 = vsyncpa [#allocation11], 0
    %23 = vsyncpa [#allocation14], 0
    %24 = vsyncpa [#allocation17], 0
    %25 = vsyncpa [#allocation20], 0
    %26 = vsyncpa [#allocation23], 0
    %27 = vsyncpa [#allocation26], 0
    %28 = vsyncpa [#allocation6], 0
    %s29 = scalar_lea.sflag [#allocation6], 1
    %30 = vsyncpa %s29, 0
    loop: start=0, step=1, limit=4
    $region2: #{tpu_custom_call.1} parent=1 // loop_pre_header
      _
    $region3: #{tpu_custom_call.1} parent=1 // loop_header
      %s32 = sphi 0, %s36
      %p33 = scmp.ge.s32.totalorder %s32, 4
      %s39 = sphi 0, %s51
      %s40 = sphi 0, %s47
      %s41 = sphi 0, %s39
      %s42 = sphi 0, %s40
      %s43 = sphi 0, %s41
      %s44 = sphi 0, %s42
      %s54 = sphi 0, %s56
      %s57 = sphi 0, %s54
      %s58 = sphi 0, %s57
      %s74 = sphi 0, %s58
      %s78 = sphi 0, %s78
      %s80 = sphi 0, %s78
      %s81 = sphi 0, %s80
      %s95 = sphi 0, %s81
      %s99 = sphi 0, %s99
      %s101 = sphi 0, %s99
      %s102 = sphi 0, %s101
      %s116 = sphi 0, %s102
      %s120 = sphi 0, %s120
      %s122 = sphi 0, %s120
      %s123 = sphi 0, %s122
      %s137 = sphi 0, %s123
      %s141 = sphi 0, %s141
      %s143 = sphi 0, %s141
      %s144 = sphi 0, %s143
      %s158 = sphi 0, %s144
      %s162 = sphi 0, %s162
      %s164 = sphi 0, %s162
      %s165 = sphi 0, %s164
      %s179 = sphi 0, %s165
      %s183 = sphi 0, %s183
      %s185 = sphi 0, %s183
      %s186 = sphi 0, %s185
      %s200 = sphi 0, %s186
      %s204 = sphi 0, %s204
      %s206 = sphi 0, %s204
      %s207 = sphi 0, %s206
      %s221 = sphi 0, %s207
      %s225 = sphi 0, %s225
      %s227 = sphi 0, %s225
      %s228 = sphi 0, %s227
      %s242 = sphi 0, %s228
      %s246 = sphi 0, %s246
      %s248 = sphi 0, %s246
      %s249 = sphi 0, %s248
      %s263 = sphi 0, %s249
      %s267 = sphi 0, %s267
      %s269 = sphi 0, %s267
      %s270 = sphi 0, %s269
      %s284 = sphi 0, %s270
      %s288 = sphi 0, %s288
      %s290 = sphi 0, %s288
      %s291 = sphi 0, %s290
      %s305 = sphi 0, %s291
      %s309 = sphi 0, %s309
      %s311 = sphi 0, %s309
      %s312 = sphi 0, %s311
      %s326 = sphi 0, %s312
      %s330 = sphi 0, %s330
      %s332 = sphi 0, %s330
      %s333 = sphi 0, %s332
      %s347 = sphi 0, %s333
      %s351 = sphi 0, %s351
      %s353 = sphi 0, %s351
      %s354 = sphi 0, %s353
      %s368 = sphi 0, %s354
      %s376 = sphi 0, %s378
      %s379 = sphi 0, %s376
      %s380 = sphi 0, %s379
      %s396 = sphi 0, %s380
    $region4: #{tpu_custom_call.1} parent=1 // loop_header_branch
      %35 = sbr.rel (%p33) target = $region8
    $region5: #{tpu_custom_call.1} parent=1 // loop_body
      %s37 = ssub.s32 %s32, 1
      %s38 = ssub.s32 %s32, 2
      %s45 = sadd.s32 1, %s40
      %p46 = scmp.ge.s32.totalorder %s45, 1
      %s47 = scalar_select %p46, 0, %s45
      %s48 = sadd.s32 1, %s39
      %s49 = scalar_select %p46, %s48, %s39
      %p50 = scmp.ge.s32.totalorder %s49, 2
      %s51 = scalar_select %p50, 0, %s49
      %s52 = ssub.s32 %s39, %s51
      %p53 = scmp.eq.s32.totalorder %s52, 0
      %s55 = sadd.s32 %s54, 1
      %s56 = scalar_select %p53, %s54, %s55
      %p59 = pneg %p53
      %p60 = scmp.eq.s32.totalorder %s32, 1
      %p61 = por %p59, %p60
      %p62 = scmp.ne.s32.totalorder %s54, %s57
      %p63 = scmp.eq.s32.totalorder %s32, 0
      %p64 = por %p62, %p63
      %p65 = scmp.ne.s32.totalorder %s54, %s57
      %p66 = scmp.eq.s32.totalorder %s37, 1
      %p67 = por %p65, %p66
      %p68 = scmp.ne.s32.totalorder %s57, %s58
      %p69 = scmp.eq.s32.totalorder %s37, 0
      %p70 = por %p68, %p69
      %p71 = scmp.ne.s32.totalorder %s57, %s58
      %p72 = scmp.eq.s32.totalorder %s38, 1
      %p73 = por %p71, %p72
      %p75 = scmp.ne.s32.totalorder %s58, %s74
      %p76 = scmp.eq.s32.totalorder %s38, 0
      %p77 = por %p75, %p76
      %s79 = sadd.s32 %s78, 1
      %p82 = scmp.eq.s32.totalorder %s32, 1
      %p83 = scmp.ne.s32.totalorder %s78, %s80
      %p84 = scmp.eq.s32.totalorder %s32, 0
      %p85 = por %p83, %p84
      %p86 = scmp.ne.s32.totalorder %s78, %s80
      %p87 = scmp.eq.s32.totalorder %s37, 1
      %p88 = por %p86, %p87
      %p89 = scmp.ne.s32.totalorder %s80, %s81
      %p90 = scmp.eq.s32.totalorder %s37, 0
      %p91 = por %p89, %p90
      %p92 = scmp.ne.s32.totalorder %s80, %s81
      %p93 = scmp.eq.s32.totalorder %s38, 1
      %p94 = por %p92, %p93
      %p96 = scmp.ne.s32.totalorder %s81, %s95
      %p97 = scmp.eq.s32.totalorder %s38, 0
      %p98 = por %p96, %p97
      %s100 = sadd.s32 %s99, 1
      %p103 = scmp.eq.s32.totalorder %s32, 1
      %p104 = scmp.ne.s32.totalorder %s99, %s101
      %p105 = scmp.eq.s32.totalorder %s32, 0
      %p106 = por %p104, %p105
      %p107 = scmp.ne.s32.totalorder %s99, %s101
      %p108 = scmp.eq.s32.totalorder %s37, 1
      %p109 = por %p107, %p108
      %p110 = scmp.ne.s32.totalorder %s101, %s102
      %p111 = scmp.eq.s32.totalorder %s37, 0
      %p112 = por %p110, %p111
      %p113 = scmp.ne.s32.totalorder %s101, %s102
      %p114 = scmp.eq.s32.totalorder %s38, 1
      %p115 = por %p113, %p114
      %p117 = scmp.ne.s32.totalorder %s102, %s116
      %p118 = scmp.eq.s32.totalorder %s38, 0
      %p119 = por %p117, %p118
      %s121 = sadd.s32 %s120, 1
      %p124 = scmp.eq.s32.totalorder %s32, 1
      %p125 = scmp.ne.s32.totalorder %s120, %s122
      %p126 = scmp.eq.s32.totalorder %s32, 0
      %p127 = por %p125, %p126
      %p128 = scmp.ne.s32.totalorder %s120, %s122
      %p129 = scmp.eq.s32.totalorder %s37, 1
      %p130 = por %p128, %p129
      %p131 = scmp.ne.s32.totalorder %s122, %s123
      %p132 = scmp.eq.s32.totalorder %s37, 0
      %p133 = por %p131, %p132
      %p134 = scmp.ne.s32.totalorder %s122, %s123
      %p135 = scmp.eq.s32.totalorder %s38, 1
      %p136 = por %p134, %p135
      %p138 = scmp.ne.s32.totalorder %s123, %s137
      %p139 = scmp.eq.s32.totalorder %s38, 0
      %p140 = por %p138, %p139
      %s142 = sadd.s32 %s141, 1
      %p145 = scmp.eq.s32.totalorder %s32, 1
      %p146 = scmp.ne.s32.totalorder %s141, %s143
      %p147 = scmp.eq.s32.totalorder %s32, 0
      %p148 = por %p146, %p147
      %p149 = scmp.ne.s32.totalorder %s141, %s143
      %p150 = scmp.eq.s32.totalorder %s37, 1
      %p151 = por %p149, %p150
      %p152 = scmp.ne.s32.totalorder %s143, %s144
      %p153 = scmp.eq.s32.totalorder %s37, 0
      %p154 = por %p152, %p153
      %p155 = scmp.ne.s32.totalorder %s143, %s144
      %p156 = scmp.eq.s32.totalorder %s38, 1
      %p157 = por %p155, %p156
      %p159 = scmp.ne.s32.totalorder %s144, %s158
      %p160 = scmp.eq.s32.totalorder %s38, 0
      %p161 = por %p159, %p160
      %s163 = sadd.s32 %s162, 1
      %p166 = scmp.eq.s32.totalorder %s32, 1
      %p167 = scmp.ne.s32.totalorder %s162, %s164
      %p168 = scmp.eq.s32.totalorder %s32, 0
      %p169 = por %p167, %p168
      %p170 = scmp.ne.s32.totalorder %s162, %s164
      %p171 = scmp.eq.s32.totalorder %s37, 1
      %p172 = por %p170, %p171
      %p173 = scmp.ne.s32.totalorder %s164, %s165
      %p174 = scmp.eq.s32.totalorder %s37, 0
      %p175 = por %p173, %p174
      %p176 = scmp.ne.s32.totalorder %s164, %s165
      %p177 = scmp.eq.s32.totalorder %s38, 1
      %p178 = por %p176, %p177
      %p180 = scmp.ne.s32.totalorder %s165, %s179
      %p181 = scmp.eq.s32.totalorder %s38, 0
      %p182 = por %p180, %p181
      %s184 = sadd.s32 %s183, 1
      %p187 = scmp.eq.s32.totalorder %s32, 1
      %p188 = scmp.ne.s32.totalorder %s183, %s185
      %p189 = scmp.eq.s32.totalorder %s32, 0
      %p190 = por %p188, %p189
      %p191 = scmp.ne.s32.totalorder %s183, %s185
      %p192 = scmp.eq.s32.totalorder %s37, 1
      %p193 = por %p191, %p192
      %p194 = scmp.ne.s32.totalorder %s185, %s186
      %p195 = scmp.eq.s32.totalorder %s37, 0
      %p196 = por %p194, %p195
      %p197 = scmp.ne.s32.totalorder %s185, %s186
      %p198 = scmp.eq.s32.totalorder %s38, 1
      %p199 = por %p197, %p198
      %p201 = scmp.ne.s32.totalorder %s186, %s200
      %p202 = scmp.eq.s32.totalorder %s38, 0
      %p203 = por %p201, %p202
      %s205 = sadd.s32 %s204, 1
      %p208 = scmp.eq.s32.totalorder %s32, 1
      %p209 = scmp.ne.s32.totalorder %s204, %s206
      %p210 = scmp.eq.s32.totalorder %s32, 0
      %p211 = por %p209, %p210
      %p212 = scmp.ne.s32.totalorder %s204, %s206
      %p213 = scmp.eq.s32.totalorder %s37, 1
      %p214 = por %p212, %p213
      %p215 = scmp.ne.s32.totalorder %s206, %s207
      %p216 = scmp.eq.s32.totalorder %s37, 0
      %p217 = por %p215, %p216
      %p218 = scmp.ne.s32.totalorder %s206, %s207
      %p219 = scmp.eq.s32.totalorder %s38, 1
      %p220 = por %p218, %p219
      %p222 = scmp.ne.s32.totalorder %s207, %s221
      %p223 = scmp.eq.s32.totalorder %s38, 0
      %p224 = por %p222, %p223
      %s226 = sadd.s32 %s225, 1
      %p229 = scmp.eq.s32.totalorder %s32, 1
      %p230 = scmp.ne.s32.totalorder %s225, %s227
      %p231 = scmp.eq.s32.totalorder %s32, 0
      %p232 = por %p230, %p231
      %p233 = scmp.ne.s32.totalorder %s225, %s227
      %p234 = scmp.eq.s32.totalorder %s37, 1
      %p235 = por %p233, %p234
      %p236 = scmp.ne.s32.totalorder %s227, %s228
      %p237 = scmp.eq.s32.totalorder %s37, 0
      %p238 = por %p236, %p237
      %p239 = scmp.ne.s32.totalorder %s227, %s228
      %p240 = scmp.eq.s32.totalorder %s38, 1
      %p241 = por %p239, %p240
      %p243 = scmp.ne.s32.totalorder %s228, %s242
      %p244 = scmp.eq.s32.totalorder %s38, 0
      %p245 = por %p243, %p244
      %s247 = sadd.s32 %s246, 1
      %p250 = scmp.eq.s32.totalorder %s32, 1
      %p251 = scmp.ne.s32.totalorder %s246, %s248
      %p252 = scmp.eq.s32.totalorder %s32, 0
      %p253 = por %p251, %p252
      %p254 = scmp.ne.s32.totalorder %s246, %s248
      %p255 = scmp.eq.s32.totalorder %s37, 1
      %p256 = por %p254, %p255
      %p257 = scmp.ne.s32.totalorder %s248, %s249
      %p258 = scmp.eq.s32.totalorder %s37, 0
      %p259 = por %p257, %p258
      %p260 = scmp.ne.s32.totalorder %s248, %s249
      %p261 = scmp.eq.s32.totalorder %s38, 1
      %p262 = por %p260, %p261
      %p264 = scmp.ne.s32.totalorder %s249, %s263
      %p265 = scmp.eq.s32.totalorder %s38, 0
      %p266 = por %p264, %p265
      %s268 = sadd.s32 %s267, 1
      %p271 = scmp.eq.s32.totalorder %s32, 1
      %p272 = scmp.ne.s32.totalorder %s267, %s269
      %p273 = scmp.eq.s32.totalorder %s32, 0
      %p274 = por %p272, %p273
      %p275 = scmp.ne.s32.totalorder %s267, %s269
      %p276 = scmp.eq.s32.totalorder %s37, 1
      %p277 = por %p275, %p276
      %p278 = scmp.ne.s32.totalorder %s269, %s270
      %p279 = scmp.eq.s32.totalorder %s37, 0
      %p280 = por %p278, %p279
      %p281 = scmp.ne.s32.totalorder %s269, %s270
      %p282 = scmp.eq.s32.totalorder %s38, 1
      %p283 = por %p281, %p282
      %p285 = scmp.ne.s32.totalorder %s270, %s284
      %p286 = scmp.eq.s32.totalorder %s38, 0
      %p287 = por %p285, %p286
      %s289 = sadd.s32 %s288, 1
      %p292 = scmp.eq.s32.totalorder %s32, 1
      %p293 = scmp.ne.s32.totalorder %s288, %s290
      %p294 = scmp.eq.s32.totalorder %s32, 0
      %p295 = por %p293, %p294
      %p296 = scmp.ne.s32.totalorder %s288, %s290
      %p297 = scmp.eq.s32.totalorder %s37, 1
      %p298 = por %p296, %p297
      %p299 = scmp.ne.s32.totalorder %s290, %s291
      %p300 = scmp.eq.s32.totalorder %s37, 0
      %p301 = por %p299, %p300
      %p302 = scmp.ne.s32.totalorder %s290, %s291
      %p303 = scmp.eq.s32.totalorder %s38, 1
      %p304 = por %p302, %p303
      %p306 = scmp.ne.s32.totalorder %s291, %s305
      %p307 = scmp.eq.s32.totalorder %s38, 0
      %p308 = por %p306, %p307
      %s310 = sadd.s32 %s309, 1
      %p313 = scmp.eq.s32.totalorder %s32, 1
      %p314 = scmp.ne.s32.totalorder %s309, %s311
      %p315 = scmp.eq.s32.totalorder %s32, 0
      %p316 = por %p314, %p315
      %p317 = scmp.ne.s32.totalorder %s309, %s311
      %p318 = scmp.eq.s32.totalorder %s37, 1
      %p319 = por %p317, %p318
      %p320 = scmp.ne.s32.totalorder %s311, %s312
      %p321 = scmp.eq.s32.totalorder %s37, 0
      %p322 = por %p320, %p321
      %p323 = scmp.ne.s32.totalorder %s311, %s312
      %p324 = scmp.eq.s32.totalorder %s38, 1
      %p325 = por %p323, %p324
      %p327 = scmp.ne.s32.totalorder %s312, %s326
      %p328 = scmp.eq.s32.totalorder %s38, 0
      %p329 = por %p327, %p328
      %s331 = sadd.s32 %s330, 1
      %p334 = scmp.eq.s32.totalorder %s32, 1
      %p335 = scmp.ne.s32.totalorder %s330, %s332
      %p336 = scmp.eq.s32.totalorder %s32, 0
      %p337 = por %p335, %p336
      %p338 = scmp.ne.s32.totalorder %s330, %s332
      %p339 = scmp.eq.s32.totalorder %s37, 1
      %p340 = por %p338, %p339
      %p341 = scmp.ne.s32.totalorder %s332, %s333
      %p342 = scmp.eq.s32.totalorder %s37, 0
      %p343 = por %p341, %p342
      %p344 = scmp.ne.s32.totalorder %s332, %s333
      %p345 = scmp.eq.s32.totalorder %s38, 1
      %p346 = por %p344, %p345
      %p348 = scmp.ne.s32.totalorder %s333, %s347
      %p349 = scmp.eq.s32.totalorder %s38, 0
      %p350 = por %p348, %p349
      %s352 = sadd.s32 %s351, 1
      %p355 = scmp.eq.s32.totalorder %s32, 1
      %p356 = scmp.ne.s32.totalorder %s351, %s353
      %p357 = scmp.eq.s32.totalorder %s32, 0
      %p358 = por %p356, %p357
      %p359 = scmp.ne.s32.totalorder %s351, %s353
      %p360 = scmp.eq.s32.totalorder %s37, 1
      %p361 = por %p359, %p360
      %p362 = scmp.ne.s32.totalorder %s353, %s354
      %p363 = scmp.eq.s32.totalorder %s37, 0
      %p364 = por %p362, %p363
      %p365 = scmp.ne.s32.totalorder %s353, %s354
      %p366 = scmp.eq.s32.totalorder %s38, 1
      %p367 = por %p365, %p366
      %p369 = scmp.ne.s32.totalorder %s354, %s368
      %p370 = scmp.eq.s32.totalorder %s38, 0
      %p371 = por %p369, %p370
      %s372 = ssub.s32 %s39, %s51
      %s373 = ssub.s32 %s40, %s47
      %s374 = sor.u32 %s372, %s373
      %p375 = scmp.eq.s32.totalorder %s374, 0
      %s377 = sadd.s32 %s376, 1
      %s378 = scalar_select %p375, %s376, %s377
      %p381 = pneg %p375
      %p382 = scmp.eq.s32.totalorder %s32, 1
      %p383 = por %p381, %p382
      %p384 = scmp.ne.s32.totalorder %s376, %s379
      %p385 = scmp.eq.s32.totalorder %s32, 0
      %p386 = por %p384, %p385
      %p387 = scmp.ne.s32.totalorder %s376, %s379
      %p388 = scmp.eq.s32.totalorder %s37, 1
      %p389 = por %p387, %p388
      %p390 = scmp.ne.s32.totalorder %s379, %s380
      %p391 = scmp.eq.s32.totalorder %s37, 0
      %p392 = por %p390, %p391
      %p393 = scmp.ne.s32.totalorder %s379, %s380
      %p394 = scmp.eq.s32.totalorder %s38, 1
      %p395 = por %p393, %p394
      %p397 = scmp.ne.s32.totalorder %s380, %s396
      %p398 = scmp.eq.s32.totalorder %s38, 0
      %p399 = por %p397, %p398
      %p400 = scmp.le.s32.totalorder 1, %s32
      %p401 = scmp.lt.s32.totalorder %s32, 3
      %p402 = pnand %p400, %p401
      %p403 = pneg %p402
      // Predicated region
      $region9: #{tpu_custom_call.1} parent=5 // pred_check
        _
      $region10: #{tpu_custom_call.1} parent=5 // pred_check_branch
        %405 = sbr.rel (%p402) target = $region12
      $region11: #{tpu_custom_call.1} parent=5 // pred_region
        %s406 = ssub.s32 %s32, 1
        // Predicated region
        $region13: #{tpu_custom_call.1} parent=11 // pred_check
          %p407 = pneg %p70
        $region14: #{tpu_custom_call.1} parent=11 // pred_check_branch
          %409 = sbr.rel (%p407) target = $region16
        $region15: #{tpu_custom_call.1} parent=11 // pred_region
          %s411 = ssub.s32 128, 128
          %412 = vsyncadd [#allocation5], %s411
          %s413 = smul.addr %s41, 128
          %s414 = scalar_lea.hbm %s0, %s413
          %s416 = sshll.u32 [#allocation4], 4
          %s417 = int_to_ptr.vmem [resolvable:$true] %s416
          %419 = dma.hbm_to_vmem [thread:$0]  %s414, 128, %s417, [#allocation5]
        $region16: #{tpu_custom_call.1} parent=11 // pred_fallthru
          _
        // Predicated region
        $region17: #{tpu_custom_call.1} parent=11 // pred_check
          %p420 = pneg %p91
        $region18: #{tpu_custom_call.1} parent=11 // pred_check_branch
          %422 = sbr.rel (%p420) target = $region20
        $region19: #{tpu_custom_call.1} parent=11 // pred_region
          %s424 = ssub.s32 2048, 2048
          %425 = vsyncadd [#allocation8], %s424
          %s426 = sshll.u32 [#allocation7], 4
          %s427 = int_to_ptr.vmem [resolvable:$true] %s426
          %432 = dma.hbm_to_vmem [thread:$0]  %s1, 2048, %s427, [#allocation8], 128, 128, 8
        $region20: #{tpu_custom_call.1} parent=11 // pred_fallthru
          _
        // Predicated region
        $region21: #{tpu_custom_call.1} parent=11 // pred_check
          %p433 = pneg %p112
        $region22: #{tpu_custom_call.1} parent=11 // pred_check_branch
          %435 = sbr.rel (%p433) target = $region24
        $region23: #{tpu_custom_call.1} parent=11 // pred_region
          %s437 = ssub.s32 64, 64
          %438 = vsyncadd [#allocation8], %s437
          %s439 = sshll.u32 [#allocation9], 4
          %s440 = int_to_ptr.vmem [resolvable:$true] %s439
          %445 = dma.hbm_to_vmem [thread:$0]  %s2, 64, %s440, [#allocation8], 16, 16, 1
        $region24: #{tpu_custom_call.1} parent=11 // pred_fallthru
          _
        // Predicated region
        $region25: #{tpu_custom_call.1} parent=11 // pred_check
          %p446 = pneg %p133
        $region26: #{tpu_custom_call.1} parent=11 // pred_check_branch
          %448 = sbr.rel (%p446) target = $region28
        $region27: #{tpu_custom_call.1} parent=11 // pred_region
          %s450 = ssub.s32 2048, 2048
          %451 = vsyncadd [#allocation11], %s450
          %s452 = sshll.u32 [#allocation10], 4
          %s453 = int_to_ptr.vmem [resolvable:$true] %s452
          %458 = dma.hbm_to_vmem [thread:$0]  %s3, 2048, %s453, [#allocation11], 128, 128, 8
        $region28: #{tpu_custom_call.1} parent=11 // pred_fallthru
          _
        // Predicated region
        $region29: #{tpu_custom_call.1} parent=11 // pred_check
          %p459 = pneg %p154
        $region30: #{tpu_custom_call.1} parent=11 // pred_check_branch
          %461 = sbr.rel (%p459) target = $region32
        $region31: #{tpu_custom_call.1} parent=11 // pred_region
          %s463 = ssub.s32 64, 64
          %464 = vsyncadd [#allocation11], %s463
          %s465 = sshll.u32 [#allocation12], 4
          %s466 = int_to_ptr.vmem [resolvable:$true] %s465
          %471 = dma.hbm_to_vmem [thread:$0]  %s4, 64, %s466, [#allocation11], 16, 16, 1
        $region32: #{tpu_custom_call.1} parent=11 // pred_fallthru
          _
        // Predicated region
        $region33: #{tpu_custom_call.1} parent=11 // pred_check
          %p472 = pneg %p175
        $region34: #{tpu_custom_call.1} parent=11 // pred_check_branch
          %474 = sbr.rel (%p472) target = $region36
        $region35: #{tpu_custom_call.1} parent=11 // pred_region
          %s476 = ssub.s32 512, 512
          %477 = vsyncadd [#allocation14], %s476
          %s478 = sshll.u32 [#allocation13], 4
          %s479 = int_to_ptr.vmem [resolvable:$true] %s478
          %484 = dma.hbm_to_vmem [thread:$0]  %s5, 512, %s479, [#allocation14], 128, 128, 8
        $region36: #{tpu_custom_call.1} parent=11 // pred_fallthru
          _
        // Predicated region
        $region37: #{tpu_custom_call.1} parent=11 // pred_check
          %p485 = pneg %p196
        $region38: #{tpu_custom_call.1} parent=11 // pred_check_branch
          %487 = sbr.rel (%p485) target = $region40
        $region39: #{tpu_custom_call.1} parent=11 // pred_region
          %s489 = ssub.s32 16, 16
          %490 = vsyncadd [#allocation14], %s489
          %s492 = sshll.u32 [#allocation15], 4
          %s493 = int_to_ptr.vmem [resolvable:$true] %s492
          %495 = dma.hbm_to_vmem [thread:$0]  %s6, 16, %s493, [#allocation14]
        $region40: #{tpu_custom_call.1} parent=11 // pred_fallthru
          _
        // Predicated region
        $region41: #{tpu_custom_call.1} parent=11 // pred_check
          %p496 = pneg %p217
        $region42: #{tpu_custom_call.1} parent=11 // pred_check_branch
          %498 = sbr.rel (%p496) target = $region44
        $region43: #{tpu_custom_call.1} parent=11 // pred_region
          %s500 = ssub.s32 16, 16
          %501 = vsyncadd [#allocation17], %s500
          %s503 = sshll.u32 [#allocation16], 4
          %s504 = int_to_ptr.vmem [resolvable:$true] %s503
          %506 = dma.hbm_to_vmem [thread:$0]  %s7, 16, %s504, [#allocation17]
        $region44: #{tpu_custom_call.1} parent=11 // pred_fallthru
          _
        // Predicated region
        $region45: #{tpu_custom_call.1} parent=11 // pred_check
          %p507 = pneg %p238
        $region46: #{tpu_custom_call.1} parent=11 // pred_check_branch
          %509 = sbr.rel (%p507) target = $region48
        $region47: #{tpu_custom_call.1} parent=11 // pred_region
          %s511 = ssub.s32 16, 16
          %512 = vsyncadd [#allocation17], %s511
          %s514 = sshll.u32 [#allocation18], 4
          %s515 = int_to_ptr.vmem [resolvable:$true] %s514
          %517 = dma.hbm_to_vmem [thread:$0]  %s8, 16, %s515, [#allocation17]
        $region48: #{tpu_custom_call.1} parent=11 // pred_fallthru
          _
        // Predicated region
        $region49: #{tpu_custom_call.1} parent=11 // pred_check
          %p518 = pneg %p259
        $region50: #{tpu_custom_call.1} parent=11 // pred_check_branch
          %520 = sbr.rel (%p518) target = $region52
        $region51: #{tpu_custom_call.1} parent=11 // pred_region
          %s522 = ssub.s32 512, 512
          %523 = vsyncadd [#allocation20], %s522
          %s524 = sshll.u32 [#allocation19], 4
          %s525 = int_to_ptr.vmem [resolvable:$true] %s524
          %530 = dma.hbm_to_vmem [thread:$0]  %s9, 512, %s525, [#allocation20], 128, 128, 8
        $region52: #{tpu_custom_call.1} parent=11 // pred_fallthru
          _
        // Predicated region
        $region53: #{tpu_custom_call.1} parent=11 // pred_check
          %p531 = pneg %p280
        $region54: #{tpu_custom_call.1} parent=11 // pred_check_branch
          %533 = sbr.rel (%p531) target = $region56
        $region55: #{tpu_custom_call.1} parent=11 // pred_region
          %s535 = ssub.s32 16, 16
          %536 = vsyncadd [#allocation20], %s535
          %s538 = sshll.u32 [#allocation21], 4
          %s539 = int_to_ptr.vmem [resolvable:$true] %s538
          %541 = dma.hbm_to_vmem [thread:$0]  %s10, 16, %s539, [#allocation20]
        $region56: #{tpu_custom_call.1} parent=11 // pred_fallthru
          _
        // Predicated region
        $region57: #{tpu_custom_call.1} parent=11 // pred_check
          %p542 = pneg %p301
        $region58: #{tpu_custom_call.1} parent=11 // pred_check_branch
          %544 = sbr.rel (%p542) target = $region60
        $region59: #{tpu_custom_call.1} parent=11 // pred_region
          %s546 = ssub.s32 2048, 2048
          %547 = vsyncadd [#allocation23], %s546
          %s548 = sshll.u32 [#allocation22], 4
          %s549 = int_to_ptr.vmem [resolvable:$true] %s548
          %554 = dma.hbm_to_vmem [thread:$0]  %s11, 2048, %s549, [#allocation23], 128, 128, 8
        $region60: #{tpu_custom_call.1} parent=11 // pred_fallthru
          _
        // Predicated region
        $region61: #{tpu_custom_call.1} parent=11 // pred_check
          %p555 = pneg %p322
        $region62: #{tpu_custom_call.1} parent=11 // pred_check_branch
          %557 = sbr.rel (%p555) target = $region64
        $region63: #{tpu_custom_call.1} parent=11 // pred_region
          %s559 = ssub.s32 16, 16
          %560 = vsyncadd [#allocation23], %s559
          %s562 = sshll.u32 [#allocation24], 4
          %s563 = int_to_ptr.vmem [resolvable:$true] %s562
          %565 = dma.hbm_to_vmem [thread:$0]  %s12, 16, %s563, [#allocation23]
        $region64: #{tpu_custom_call.1} parent=11 // pred_fallthru
          _
        // Predicated region
        $region65: #{tpu_custom_call.1} parent=11 // pred_check
          %p566 = pneg %p343
        $region66: #{tpu_custom_call.1} parent=11 // pred_check_branch
          %568 = sbr.rel (%p566) target = $region68
        $region67: #{tpu_custom_call.1} parent=11 // pred_region
          %s570 = ssub.s32 16, 16
          %571 = vsyncadd [#allocation26], %s570
          %s573 = sshll.u32 [#allocation25], 4
          %s574 = int_to_ptr.vmem [resolvable:$true] %s573
          %576 = dma.hbm_to_vmem [thread:$0]  %s13, 16, %s574, [#allocation26]
        $region68: #{tpu_custom_call.1} parent=11 // pred_fallthru
          _
        // Predicated region
        $region69: #{tpu_custom_call.1} parent=11 // pred_check
          %p577 = pneg %p364
        $region70: #{tpu_custom_call.1} parent=11 // pred_check_branch
          %579 = sbr.rel (%p577) target = $region72
        $region71: #{tpu_custom_call.1} parent=11 // pred_region
          %s581 = ssub.s32 16, 16
          %582 = vsyncadd [#allocation26], %s581
          %s584 = sshll.u32 [#allocation27], 4
          %s585 = int_to_ptr.vmem [resolvable:$true] %s584
          %587 = dma.hbm_to_vmem [thread:$0]  %s14, 16, %s585, [#allocation26]
        $region72: #{tpu_custom_call.1} parent=11 // pred_fallthru
          _
      $region12: #{tpu_custom_call.1} parent=5 // pred_fallthru
        _
      %p588 = scmp.lt.s32.totalorder %s32, 2
      // Predicated region
      $region73: #{tpu_custom_call.1} parent=5 // pred_check
        %p589 = pneg %p588
      $region74: #{tpu_custom_call.1} parent=5 // pred_check_branch
        %591 = sbr.rel (%p589) target = $region76
      $region75: #{tpu_custom_call.1} parent=5 // pred_region
        _
      $region76: #{tpu_custom_call.1} parent=5 // pred_fallthru
        _
      %p592 = scmp.le.s32.totalorder 1, %s32
      %p593 = scmp.lt.s32.totalorder %s32, 3
      %p594 = pnand %p592, %p593
      %p595 = pneg %p594
      // Predicated region
      $region77: #{tpu_custom_call.1} parent=5 // pred_check
        _
      $region78: #{tpu_custom_call.1} parent=5 // pred_check_branch
        %597 = sbr.rel (%p594) target = $region80
      $region79: #{tpu_custom_call.1} parent=5 // pred_region
        %s598 = ssub.s32 %s32, 1
        // Predicated region
        $region81: #{tpu_custom_call.1} parent=79 // pred_check
          %p599 = pneg %p70
        $region82: #{tpu_custom_call.1} parent=79 // pred_check_branch
          %601 = sbr.rel (%p599) target = $region84
        $region83: #{tpu_custom_call.1} parent=79 // pred_region
          %602 = dma.done [#allocation5], 128
        $region84: #{tpu_custom_call.1} parent=79 // pred_fallthru
          _
        // Predicated region
        $region85: #{tpu_custom_call.1} parent=79 // pred_check
          %p603 = pneg %p91
        $region86: #{tpu_custom_call.1} parent=79 // pred_check_branch
          %605 = sbr.rel (%p603) target = $region88
        $region87: #{tpu_custom_call.1} parent=79 // pred_region
          %606 = dma.done [#allocation8], 2048
        $region88: #{tpu_custom_call.1} parent=79 // pred_fallthru
          _
        // Predicated region
        $region89: #{tpu_custom_call.1} parent=79 // pred_check
          %p607 = pneg %p112
        $region90: #{tpu_custom_call.1} parent=79 // pred_check_branch
          %609 = sbr.rel (%p607) target = $region92
        $region91: #{tpu_custom_call.1} parent=79 // pred_region
          %610 = dma.done [#allocation8], 64
        $region92: #{tpu_custom_call.1} parent=79 // pred_fallthru
          _
        // Predicated region
        $region93: #{tpu_custom_call.1} parent=79 // pred_check
          %p611 = pneg %p133
        $region94: #{tpu_custom_call.1} parent=79 // pred_check_branch
          %613 = sbr.rel (%p611) target = $region96
        $region95: #{tpu_custom_call.1} parent=79 // pred_region
          %614 = dma.done [#allocation11], 2048
        $region96: #{tpu_custom_call.1} parent=79 // pred_fallthru
          _
        // Predicated region
        $region97: #{tpu_custom_call.1} parent=79 // pred_check
          %p615 = pneg %p154
        $region98: #{tpu_custom_call.1} parent=79 // pred_check_branch
          %617 = sbr.rel (%p615) target = $region100
        $region99: #{tpu_custom_call.1} parent=79 // pred_region
          %618 = dma.done [#allocation11], 64
        $region100: #{tpu_custom_call.1} parent=79 // pred_fallthru
          _
        // Predicated region
        $region101: #{tpu_custom_call.1} parent=79 // pred_check
          %p619 = pneg %p175
        $region102: #{tpu_custom_call.1} parent=79 // pred_check_branch
          %621 = sbr.rel (%p619) target = $region104
        $region103: #{tpu_custom_call.1} parent=79 // pred_region
          %622 = dma.done [#allocation14], 512
        $region104: #{tpu_custom_call.1} parent=79 // pred_fallthru
          _
        // Predicated region
        $region105: #{tpu_custom_call.1} parent=79 // pred_check
          %p623 = pneg %p196
        $region106: #{tpu_custom_call.1} parent=79 // pred_check_branch
          %625 = sbr.rel (%p623) target = $region108
        $region107: #{tpu_custom_call.1} parent=79 // pred_region
          %626 = dma.done [#allocation14], 16
        $region108: #{tpu_custom_call.1} parent=79 // pred_fallthru
          _
        // Predicated region
        $region109: #{tpu_custom_call.1} parent=79 // pred_check
          %p627 = pneg %p217
        $region110: #{tpu_custom_call.1} parent=79 // pred_check_branch
          %629 = sbr.rel (%p627) target = $region112
        $region111: #{tpu_custom_call.1} parent=79 // pred_region
          %630 = dma.done [#allocation17], 16
        $region112: #{tpu_custom_call.1} parent=79 // pred_fallthru
          _
        // Predicated region
        $region113: #{tpu_custom_call.1} parent=79 // pred_check
          %p631 = pneg %p238
        $region114: #{tpu_custom_call.1} parent=79 // pred_check_branch
          %633 = sbr.rel (%p631) target = $region116
        $region115: #{tpu_custom_call.1} parent=79 // pred_region
          %634 = dma.done [#allocation17], 16
        $region116: #{tpu_custom_call.1} parent=79 // pred_fallthru
          _
        // Predicated region
        $region117: #{tpu_custom_call.1} parent=79 // pred_check
          %p635 = pneg %p259
        $region118: #{tpu_custom_call.1} parent=79 // pred_check_branch
          %637 = sbr.rel (%p635) target = $region120
        $region119: #{tpu_custom_call.1} parent=79 // pred_region
          %638 = dma.done [#allocation20], 512
        $region120: #{tpu_custom_call.1} parent=79 // pred_fallthru
          _
        // Predicated region
        $region121: #{tpu_custom_call.1} parent=79 // pred_check
          %p639 = pneg %p280
        $region122: #{tpu_custom_call.1} parent=79 // pred_check_branch
          %641 = sbr.rel (%p639) target = $region124
        $region123: #{tpu_custom_call.1} parent=79 // pred_region
          %642 = dma.done [#allocation20], 16
        $region124: #{tpu_custom_call.1} parent=79 // pred_fallthru
          _
        // Predicated region
        $region125: #{tpu_custom_call.1} parent=79 // pred_check
          %p643 = pneg %p301
        $region126: #{tpu_custom_call.1} parent=79 // pred_check_branch
          %645 = sbr.rel (%p643) target = $region128
        $region127: #{tpu_custom_call.1} parent=79 // pred_region
          %646 = dma.done [#allocation23], 2048
        $region128: #{tpu_custom_call.1} parent=79 // pred_fallthru
          _
        // Predicated region
        $region129: #{tpu_custom_call.1} parent=79 // pred_check
          %p647 = pneg %p322
        $region130: #{tpu_custom_call.1} parent=79 // pred_check_branch
          %649 = sbr.rel (%p647) target = $region132
        $region131: #{tpu_custom_call.1} parent=79 // pred_region
          %650 = dma.done [#allocation23], 16
        $region132: #{tpu_custom_call.1} parent=79 // pred_fallthru
          _
        // Predicated region
        $region133: #{tpu_custom_call.1} parent=79 // pred_check
          %p651 = pneg %p343
        $region134: #{tpu_custom_call.1} parent=79 // pred_check_branch
          %653 = sbr.rel (%p651) target = $region136
        $region135: #{tpu_custom_call.1} parent=79 // pred_region
          %654 = dma.done [#allocation26], 16
        $region136: #{tpu_custom_call.1} parent=79 // pred_fallthru
          _
        // Predicated region
        $region137: #{tpu_custom_call.1} parent=79 // pred_check
          %p655 = pneg %p364
        $region138: #{tpu_custom_call.1} parent=79 // pred_check_branch
          %657 = sbr.rel (%p655) target = $region140
        $region139: #{tpu_custom_call.1} parent=79 // pred_region
          %658 = dma.done [#allocation26], 16
        $region140: #{tpu_custom_call.1} parent=79 // pred_fallthru
          _
        %p659 = pneg %p70
        %p660 = pneg %p67
        %p661 = pneg %p91
        %p662 = pneg %p88
        %p663 = pneg %p112
        %p664 = pneg %p109
        %p665 = pneg %p133
        %p666 = pneg %p130
        %p667 = pneg %p154
        %p668 = pneg %p151
        %p669 = pneg %p175
        %p670 = pneg %p172
        %p671 = pneg %p196
        %p672 = pneg %p193
        %p673 = pneg %p217
        %p674 = pneg %p214
        %p675 = pneg %p238
        %p676 = pneg %p235
        %p677 = pneg %p259
        %p678 = pneg %p256
        %p679 = pneg %p280
        %p680 = pneg %p277
        %p681 = pneg %p301
        %p682 = pneg %p298
        %p683 = pneg %p322
        %p684 = pneg %p319
        %p685 = pneg %p343
        %p686 = pneg %p340
        %p687 = pneg %p364
        %p688 = pneg %p361
        %p689 = pneg %p392
        %p690 = pneg %p389
        %s691 = sand.u32 %s379, 1
        %s692 = scalar_lea.sflag [#allocation6], %s691
        %s693 = sand.u32 %s379, 1
        %s694 = smul.addr %s693, 8
        %s695 = scalar_lea.vmem [#allocation28], %s694
        %p696 = scmp.eq.s32.totalorder %s42, 0
        // Predicated region
        $region141: #{tpu_custom_call.1} parent=79 // pred_check
          %p697 = pneg %p696
        $region142: #{tpu_custom_call.1} parent=79 // pred_check_branch
          %699 = sbr.rel (%p697) target = $region144
        $region143: #{tpu_custom_call.1} parent=79 // pred_region
          %v700 = vld [vmem:[#allocation4] sm:$0xff]
          loop: start=0, step=1, limit=4
          $region145: #{tpu_custom_call.1} parent=143 // loop_pre_header
            _
          $region146: #{tpu_custom_call.1} parent=143 // loop_header
            %s702 = sphi 0, %s706
            %p703 = scmp.ge.s32.totalorder %s702, 4
          $region147: #{tpu_custom_call.1} parent=143 // loop_header_branch
            %705 = sbr.rel (%p703) target = $region151
          $region148: #{tpu_custom_call.1} parent=143 // loop_body
            %s707 = smul.u32 %s702, 32
            %s708 = scalar_lea.vmem [#allocation10], %s707
            %v709 = vld [vmem:[%s708] sm:$0xff]
            %v710 = vld [vmem:[%s708 + $0x8] sm:$0xff]
            %v711 = vld [vmem:[%s708 + $0x10] sm:$0xff]
            %v712 = vld [vmem:[%s708 + $0x18] sm:$0xff]
            %s713 = scalar_lea.vmem [#allocation12], %s702
            %v714 = vld [vmem:[%s713] sm:$0x1]
            %v716 = vlaneseq
            %v717 = vshrl.u32 %v716, 7
            %v718 = vsub.s32 0, %v717
            %v719 = vrot.slane %v714, %v718
            %vm721 = vcmask 261120
            %v723 = vsel %vm721, %v700, 0
            %725 = vmatprep.subr.mxu0 0.0
            %726 = vmatpush1.msra.mxu0 %v709
            %727 = vmatprep.subr.mxu0 0.0
            %728 = vmatpush1.msra.mxu0 %v710
            %729 = vmatprep.subr.mxu0 0.0
            %730 = vmatpush1.msra.mxu0 %v711
            %731 = vmatprep.subr.mxu0 0.0
            %732 = vmatpush1.msra.mxu0 %v712
            %733 = vmatprep.subr.mxu0 0.0
            %734 = vmatpush1.msra.mxu0 0.0
            %735 = vmatprep.subr.mxu0 0.0
            %736 = vmatpush1.msra.mxu0 0.0
            %737 = vmatprep.subr.mxu0 0.0
            %738 = vmatpush1.msra.mxu0 0.0
            %739 = vmatprep.subr.mxu0 0.0
            %740 = vmatpush1.msra.mxu0 0.0
            %741 = vmatprep.subr.mxu0 0.0
            %742 = vmatpush1.msra.mxu0 0.0
            %743 = vmatprep.subr.mxu0 0.0
            %744 = vmatpush1.msra.mxu0 0.0
            %745 = vmatprep.subr.mxu0 0.0
            %746 = vmatpush1.msra.mxu0 0.0
            %747 = vmatprep.subr.mxu0 0.0
            %748 = vmatpush1.msra.mxu0 0.0
            %749 = vmatprep.subr.mxu0 0.0
            %750 = vmatpush1.msra.mxu0 0.0
            %751 = vmatprep.subr.mxu0 0.0
            %752 = vmatpush1.msra.mxu0 0.0
            %753 = vmatprep.subr.mxu0 0.0
            %754 = vmatpush1.msra.mxu0 0.0
            %755 = vmatprep.subr.mxu0 0.0
            %756 = vmatpush1.msra.mxu0 0.0
            %757 = vmatprep.subr.mxu0 0.0
            %758 = vmatpush1.msra.mxu0 0.0
            %759 = vmatprep.subr.mxu0 0.0
            %760 = vmatpush1.msra.mxu0 0.0
            %761 = vmatprep.subr.mxu0 0.0
            %762 = vmatpush1.msra.mxu0 0.0
            %763 = vmatprep.subr.mxu0 0.0
            %764 = vmatpush1.msra.mxu0 0.0
            %765 = vmatprep.subr.mxu0 0.0
            %766 = vmatpush1.msra.mxu0 0.0
            %767 = vmatprep.subr.mxu0 0.0
            %768 = vmatpush1.msra.mxu0 0.0
            %769 = vmatprep.subr.mxu0 0.0
            %770 = vmatpush1.msra.mxu0 0.0
            %771 = vmatprep.subr.mxu0 0.0
            %772 = vmatpush1.msra.mxu0 0.0
            %773 = vmatprep.subr.mxu0 0.0
            %774 = vmatpush1.msra.mxu0 0.0
            %775 = vmatprep.subr.mxu0 0.0
            %776 = vmatpush1.msra.mxu0 0.0
            %777 = vmatprep.subr.mxu0 0.0
            %778 = vmatpush1.msra.mxu0 0.0
            %779 = vmatprep.subr.mxu0 0.0
            %780 = vmatpush1.msra.mxu0 0.0
            %781 = vmatprep.subr.mxu0 0.0
            %782 = vmatpush1.msra.mxu0 0.0
            %783 = vmatprep.subr.mxu0 0.0
            %784 = vmatpush1.msra.mxu0 0.0
            %785 = vmatprep.subr.mxu0 0.0
            %786 = vmatpush1.msra.mxu0 0.0
            %787 = vmatprep.subr.mxu0 0.0
            %788 = vmatpush1.msra.mxu0 0.0
            %789 = vmatprep.mubr.f32.mxu0 0.0
            %790 = vmatmul.mubr.f32.gmra.mrb[0].mxu0 %v723
            %v791 = vpop.f32.mrb[0].mxu0
            %v792 = vadd.f32 %v719, %v791
            %v793 = vpop.f32.mrb[0].mxu0
            %794 = vdwg.mxu0
            %s795 = smul.u32 %s702, 8
            %s796 = scalar_lea.vmem [#allocation2], %s795
            %vm797 = vcmask 64512
            %798 = vst.msk [vmem:[%s796] sm:$0xff] %vm797, %v792
            %800 = vrot.lane.b32.xlu0 %v792, 120
            %v801 = vpop.permute.xlu0 %800
            %s803 = scalar_lea.vmem [#allocation3], %s795
            %804 = vst.msk [vmem:[%s803] sm:$0xff] %vm797, %v801
          $region149: #{tpu_custom_call.1} parent=143 // loop_footer
            %s706 = sadd.s32 1, %s702
          $region150: #{tpu_custom_call.1} parent=143 // loop_footer_branch
            %701 = sbr.rel target = $region146
          $region151: #{tpu_custom_call.1} parent=143 // loop_exit
            _
        $region144: #{tpu_custom_call.1} parent=79 // pred_fallthru
          _
        %s805 = smul.u32 %s42, 8
        %s806 = scalar_lea.vmem [#allocation4], %s805
        %v807 = vld [vmem:[%s806] sm:$0xff]
        loop: start=0, step=1, limit=4
        $region152: #{tpu_custom_call.1} parent=79 // loop_pre_header
          _
        $region153: #{tpu_custom_call.1} parent=79 // loop_header
          %s809 = sphi 0, %s813
          %p810 = scmp.ge.s32.totalorder %s809, 4
          %v814 = vphi 0.0, %v1144
        $region154: #{tpu_custom_call.1} parent=79 // loop_header_branch
          %812 = sbr.rel (%p810) target = $region158
        $region155: #{tpu_custom_call.1} parent=79 // loop_body
          %s815 = smul.u32 %s809, 32
          %s816 = scalar_lea.vmem [#allocation7], %s815
          %v817 = vld [vmem:[%s816] sm:$0xff]
          %v818 = vld [vmem:[%s816 + $0x8] sm:$0xff]
          %v819 = vld [vmem:[%s816 + $0x10] sm:$0xff]
          %v820 = vld [vmem:[%s816 + $0x18] sm:$0xff]
          %s821 = scalar_lea.vmem [#allocation9], %s809
          %v822 = vld [vmem:[%s821] sm:$0x1]
          %v824 = vlaneseq
          %v825 = vshrl.u32 %v824, 7
          %v826 = vsub.s32 0, %v825
          %v827 = vrot.slane %v822, %v826
          %vm829 = vcmask 261120
          %v831 = vsel %vm829, %v807, 0
          %833 = vmatprep.subr.mxu0 0.0
          %834 = vmatpush1.msra.mxu0 %v817
          %835 = vmatprep.subr.mxu0 0.0
          %836 = vmatpush1.msra.mxu0 %v818
          %837 = vmatprep.subr.mxu0 0.0
          %838 = vmatpush1.msra.mxu0 %v819
          %839 = vmatprep.subr.mxu0 0.0
          %840 = vmatpush1.msra.mxu0 %v820
          %841 = vmatprep.subr.mxu0 0.0
          %842 = vmatpush1.msra.mxu0 0.0
          %843 = vmatprep.subr.mxu0 0.0
          %844 = vmatpush1.msra.mxu0 0.0
          %845 = vmatprep.subr.mxu0 0.0
          %846 = vmatpush1.msra.mxu0 0.0
          %847 = vmatprep.subr.mxu0 0.0
          %848 = vmatpush1.msra.mxu0 0.0
          %849 = vmatprep.subr.mxu0 0.0
          %850 = vmatpush1.msra.mxu0 0.0
          %851 = vmatprep.subr.mxu0 0.0
          %852 = vmatpush1.msra.mxu0 0.0
          %853 = vmatprep.subr.mxu0 0.0
          %854 = vmatpush1.msra.mxu0 0.0
          %855 = vmatprep.subr.mxu0 0.0
          %856 = vmatpush1.msra.mxu0 0.0
          %857 = vmatprep.subr.mxu0 0.0
          %858 = vmatpush1.msra.mxu0 0.0
          %859 = vmatprep.subr.mxu0 0.0
          %860 = vmatpush1.msra.mxu0 0.0
          %861 = vmatprep.subr.mxu0 0.0
          %862 = vmatpush1.msra.mxu0 0.0
          %863 = vmatprep.subr.mxu0 0.0
          %864 = vmatpush1.msra.mxu0 0.0
          %865 = vmatprep.subr.mxu0 0.0
          %866 = vmatpush1.msra.mxu0 0.0
          %867 = vmatprep.subr.mxu0 0.0
          %868 = vmatpush1.msra.mxu0 0.0
          %869 = vmatprep.subr.mxu0 0.0
          %870 = vmatpush1.msra.mxu0 0.0
          %871 = vmatprep.subr.mxu0 0.0
          %872 = vmatpush1.msra.mxu0 0.0
          %873 = vmatprep.subr.mxu0 0.0
          %874 = vmatpush1.msra.mxu0 0.0
          %875 = vmatprep.subr.mxu0 0.0
          %876 = vmatpush1.msra.mxu0 0.0
          %877 = vmatprep.subr.mxu0 0.0
          %878 = vmatpush1.msra.mxu0 0.0
          %879 = vmatprep.subr.mxu0 0.0
          %880 = vmatpush1.msra.mxu0 0.0
          %881 = vmatprep.subr.mxu0 0.0
          %882 = vmatpush1.msra.mxu0 0.0
          %883 = vmatprep.subr.mxu0 0.0
          %884 = vmatpush1.msra.mxu0 0.0
          %885 = vmatprep.subr.mxu0 0.0
          %886 = vmatpush1.msra.mxu0 0.0
          %887 = vmatprep.subr.mxu0 0.0
          %888 = vmatpush1.msra.mxu0 0.0
          %889 = vmatprep.subr.mxu0 0.0
          %890 = vmatpush1.msra.mxu0 0.0
          %891 = vmatprep.subr.mxu0 0.0
          %892 = vmatpush1.msra.mxu0 0.0
          %893 = vmatprep.subr.mxu0 0.0
          %894 = vmatpush1.msra.mxu0 0.0
          %895 = vmatprep.subr.mxu0 0.0
          %896 = vmatpush1.msra.mxu0 0.0
          %897 = vmatprep.mubr.f32.mxu0 0.0
          %898 = vmatmul.mubr.f32.gmra.mrb[0].mxu0 %v831
          %v899 = vpop.f32.mrb[0].mxu0
          %v900 = vadd.f32 %v827, %v899
          %v901 = vpop.f32.mrb[0].mxu0
          %902 = vdwg.mxu0
          %s903 = smul.u32 %s809, 8
          %s904 = scalar_lea.vmem [#allocation2], %s903
          %v905 = vld [vmem:[%s904] sm:$0xff]
          %vm906 = vcmask 64512
          %v908 = vsel %vm906, %v900, 0
          %v911 = vsel %vm906, %v905, 0
          %913 = vmatprep.subr.mxu0 0.0
          %914 = vmatpush1.xpose.msra.mxu0 %v911
          %915 = vmatprep.subr.mxu0 0.0
          %916 = vmatpush1.xpose.msra.mxu0 0.0
          %917 = vmatprep.subr.mxu0 0.0
          %918 = vmatpush1.xpose.msra.mxu0 0.0
          %919 = vmatprep.subr.mxu0 0.0
          %920 = vmatpush1.xpose.msra.mxu0 0.0
          %921 = vmatprep.subr.mxu0 0.0
          %922 = vmatpush1.xpose.msra.mxu0 0.0
          %923 = vmatprep.subr.mxu0 0.0
          %924 = vmatpush1.xpose.msra.mxu0 0.0
          %925 = vmatprep.subr.mxu0 0.0
          %926 = vmatpush1.xpose.msra.mxu0 0.0
          %927 = vmatprep.subr.mxu0 0.0
          %928 = vmatpush1.xpose.msra.mxu0 0.0
          %929 = vmatprep.subr.mxu0 0.0
          %930 = vmatpush1.xpose.msra.mxu0 0.0
          %931 = vmatprep.subr.mxu0 0.0
          %932 = vmatpush1.xpose.msra.mxu0 0.0
          %933 = vmatprep.subr.mxu0 0.0
          %934 = vmatpush1.xpose.msra.mxu0 0.0
          %935 = vmatprep.subr.mxu0 0.0
          %936 = vmatpush1.xpose.msra.mxu0 0.0
          %937 = vmatprep.subr.mxu0 0.0
          %938 = vmatpush1.xpose.msra.mxu0 0.0
          %939 = vmatprep.subr.mxu0 0.0
          %940 = vmatpush1.xpose.msra.mxu0 0.0
          %941 = vmatprep.subr.mxu0 0.0
          %942 = vmatpush1.xpose.msra.mxu0 0.0
          %943 = vmatprep.subr.mxu0 0.0
          %944 = vmatpush1.xpose.msra.mxu0 0.0
          %945 = vmatprep.subr.mxu0 0.0
          %946 = vmatpush1.xpose.msra.mxu0 0.0
          %947 = vmatprep.subr.mxu0 0.0
          %948 = vmatpush1.xpose.msra.mxu0 0.0
          %949 = vmatprep.subr.mxu0 0.0
          %950 = vmatpush1.xpose.msra.mxu0 0.0
          %951 = vmatprep.subr.mxu0 0.0
          %952 = vmatpush1.xpose.msra.mxu0 0.0
          %953 = vmatprep.subr.mxu0 0.0
          %954 = vmatpush1.xpose.msra.mxu0 0.0
          %955 = vmatprep.subr.mxu0 0.0
          %956 = vmatpush1.xpose.msra.mxu0 0.0
          %957 = vmatprep.subr.mxu0 0.0
          %958 = vmatpush1.xpose.msra.mxu0 0.0
          %959 = vmatprep.subr.mxu0 0.0
          %960 = vmatpush1.xpose.msra.mxu0 0.0
          %961 = vmatprep.subr.mxu0 0.0
          %962 = vmatpush1.xpose.msra.mxu0 0.0
          %963 = vmatprep.subr.mxu0 0.0
          %964 = vmatpush1.xpose.msra.mxu0 0.0
          %965 = vmatprep.subr.mxu0 0.0
          %966 = vmatpush1.xpose.msra.mxu0 0.0
          %967 = vmatprep.subr.mxu0 0.0
          %968 = vmatpush1.xpose.msra.mxu0 0.0
          %969 = vmatprep.subr.mxu0 0.0
          %970 = vmatpush1.xpose.msra.mxu0 0.0
          %971 = vmatprep.subr.mxu0 0.0
          %972 = vmatpush1.xpose.msra.mxu0 0.0
          %973 = vmatprep.subr.mxu0 0.0
          %974 = vmatpush1.xpose.msra.mxu0 0.0
          %975 = vmatprep.subr.mxu0 0.0
          %976 = vmatpush1.xpose.msra.mxu0 0.0
          %977 = vmatprep.mubr.f32.mxu0 0.0
          %978 = vmatmul.mubr.f32.gmra.mrb[0].mxu0 %v908
          %v979 = vpop.f32.mrb[0].mxu0
          %v980 = vadd.f32 0.0, %v979
          %v981 = vpop.f32.mrb[0].mxu0
          %982 = vdwg.mxu0
          %v983 = vsel %vm906, %v980, -inf
          %984 = vmax.xlane.f32.xlu0 %v983
          %v985 = vpop.xlane.xlu0 %984
          %v986 = vsub.f32 %v980, %v985
          %v987 = vmul.f32 %v986, 1.442695
          %v988 = vpow.pop %v987
          %v989 = vsel %vm906, %v988, 0.0
          %990 = vadd.xlane.f32.xlu0 %v989
          %v991 = vpop.xlane.xlu0 %990
          %v992 = vrcp.pop %v991
          %v993 = vmul.f32 %v988, %v992
          %s994 = scalar_lea.vmem [#allocation3], %s903
          %v995 = vld [vmem:[%s994] sm:$0xff]
          %v997 = vsel %vm906, %v993, 0
          %999 = vmatprep.subr.mxu0 0.0
          %1000 = vmatpush1.msra.mxu0 %v995
          %1001 = vmatprep.subr.mxu0 0.0
          %1002 = vmatpush1.msra.mxu0 0.0
          %1003 = vmatprep.subr.mxu0 0.0
          %1004 = vmatpush1.msra.mxu0 0.0
          %1005 = vmatprep.subr.mxu0 0.0
          %1006 = vmatpush1.msra.mxu0 0.0
          %1007 = vmatprep.subr.mxu0 0.0
          %1008 = vmatpush1.msra.mxu0 0.0
          %1009 = vmatprep.subr.mxu0 0.0
          %1010 = vmatpush1.msra.mxu0 0.0
          %1011 = vmatprep.subr.mxu0 0.0
          %1012 = vmatpush1.msra.mxu0 0.0
          %1013 = vmatprep.subr.mxu0 0.0
          %1014 = vmatpush1.msra.mxu0 0.0
          %1015 = vmatprep.subr.mxu0 0.0
          %1016 = vmatpush1.msra.mxu0 0.0
          %1017 = vmatprep.subr.mxu0 0.0
          %1018 = vmatpush1.msra.mxu0 0.0
          %1019 = vmatprep.subr.mxu0 0.0
          %1020 = vmatpush1.msra.mxu0 0.0
          %1021 = vmatprep.subr.mxu0 0.0
          %1022 = vmatpush1.msra.mxu0 0.0
          %1023 = vmatprep.subr.mxu0 0.0
          %1024 = vmatpush1.msra.mxu0 0.0
          %1025 = vmatprep.subr.mxu0 0.0
          %1026 = vmatpush1.msra.mxu0 0.0
          %1027 = vmatprep.subr.mxu0 0.0
          %1028 = vmatpush1.msra.mxu0 0.0
          %1029 = vmatprep.subr.mxu0 0.0
          %1030 = vmatpush1.msra.mxu0 0.0
          %1031 = vmatprep.subr.mxu0 0.0
          %1032 = vmatpush1.msra.mxu0 0.0
          %1033 = vmatprep.subr.mxu0 0.0
          %1034 = vmatpush1.msra.mxu0 0.0
          %1035 = vmatprep.subr.mxu0 0.0
          %1036 = vmatpush1.msra.mxu0 0.0
          %1037 = vmatprep.subr.mxu0 0.0
          %1038 = vmatpush1.msra.mxu0 0.0
          %1039 = vmatprep.subr.mxu0 0.0
          %1040 = vmatpush1.msra.mxu0 0.0
          %1041 = vmatprep.subr.mxu0 0.0
          %1042 = vmatpush1.msra.mxu0 0.0
          %1043 = vmatprep.subr.mxu0 0.0
          %1044 = vmatpush1.msra.mxu0 0.0
          %1045 = vmatprep.subr.mxu0 0.0
          %1046 = vmatpush1.msra.mxu0 0.0
          %1047 = vmatprep.subr.mxu0 0.0
          %1048 = vmatpush1.msra.mxu0 0.0
          %1049 = vmatprep.subr.mxu0 0.0
          %1050 = vmatpush1.msra.mxu0 0.0
          %1051 = vmatprep.subr.mxu0 0.0
          %1052 = vmatpush1.msra.mxu0 0.0
          %1053 = vmatprep.subr.mxu0 0.0
          %1054 = vmatpush1.msra.mxu0 0.0
          %1055 = vmatprep.subr.mxu0 0.0
          %1056 = vmatpush1.msra.mxu0 0.0
          %1057 = vmatprep.subr.mxu0 0.0
          %1058 = vmatpush1.msra.mxu0 0.0
          %1059 = vmatprep.subr.mxu0 0.0
          %1060 = vmatpush1.msra.mxu0 0.0
          %1061 = vmatprep.subr.mxu0 0.0
          %1062 = vmatpush1.msra.mxu0 0.0
          %1063 = vmatprep.mubr.f32.mxu0 0.0
          %1064 = vmatmul.mubr.f32.gmra.mrb[0].mxu0 %v997
          %v1065 = vpop.f32.mrb[0].mxu0
          %v1066 = vadd.f32 0.0, %v1065
          %v1067 = vpop.f32.mrb[0].mxu0
          %1068 = vdwg.mxu0
          %s1069 = scalar_lea.vmem [#allocation13], %s903
          %v1070 = vld [vmem:[%s1069] sm:$0xff]
          %v1072 = vsel %vm906, %v1066, 0
          %1074 = vmatprep.subr.mxu0 0.0
          %1075 = vmatpush1.msra.mxu0 %v1070
          %1076 = vmatprep.subr.mxu0 0.0
          %1077 = vmatpush1.msra.mxu0 0.0
          %1078 = vmatprep.subr.mxu0 0.0
          %1079 = vmatpush1.msra.mxu0 0.0
          %1080 = vmatprep.subr.mxu0 0.0
          %1081 = vmatpush1.msra.mxu0 0.0
          %1082 = vmatprep.subr.mxu0 0.0
          %1083 = vmatpush1.msra.mxu0 0.0
          %1084 = vmatprep.subr.mxu0 0.0
          %1085 = vmatpush1.msra.mxu0 0.0
          %1086 = vmatprep.subr.mxu0 0.0
          %1087 = vmatpush1.msra.mxu0 0.0
          %1088 = vmatprep.subr.mxu0 0.0
          %1089 = vmatpush1.msra.mxu0 0.0
          %1090 = vmatprep.subr.mxu0 0.0
          %1091 = vmatpush1.msra.mxu0 0.0
          %1092 = vmatprep.subr.mxu0 0.0
          %1093 = vmatpush1.msra.mxu0 0.0
          %1094 = vmatprep.subr.mxu0 0.0
          %1095 = vmatpush1.msra.mxu0 0.0
          %1096 = vmatprep.subr.mxu0 0.0
          %1097 = vmatpush1.msra.mxu0 0.0
          %1098 = vmatprep.subr.mxu0 0.0
          %1099 = vmatpush1.msra.mxu0 0.0
          %1100 = vmatprep.subr.mxu0 0.0
          %1101 = vmatpush1.msra.mxu0 0.0
          %1102 = vmatprep.subr.mxu0 0.0
          %1103 = vmatpush1.msra.mxu0 0.0
          %1104 = vmatprep.subr.mxu0 0.0
          %1105 = vmatpush1.msra.mxu0 0.0
          %1106 = vmatprep.subr.mxu0 0.0
          %1107 = vmatpush1.msra.mxu0 0.0
          %1108 = vmatprep.subr.mxu0 0.0
          %1109 = vmatpush1.msra.mxu0 0.0
          %1110 = vmatprep.subr.mxu0 0.0
          %1111 = vmatpush1.msra.mxu0 0.0
          %1112 = vmatprep.subr.mxu0 0.0
          %1113 = vmatpush1.msra.mxu0 0.0
          %1114 = vmatprep.subr.mxu0 0.0
          %1115 = vmatpush1.msra.mxu0 0.0
          %1116 = vmatprep.subr.mxu0 0.0
          %1117 = vmatpush1.msra.mxu0 0.0
          %1118 = vmatprep.subr.mxu0 0.0
          %1119 = vmatpush1.msra.mxu0 0.0
          %1120 = vmatprep.subr.mxu0 0.0
          %1121 = vmatpush1.msra.mxu0 0.0
          %1122 = vmatprep.subr.mxu0 0.0
          %1123 = vmatpush1.msra.mxu0 0.0
          %1124 = vmatprep.subr.mxu0 0.0
          %1125 = vmatpush1.msra.mxu0 0.0
          %1126 = vmatprep.subr.mxu0 0.0
          %1127 = vmatpush1.msra.mxu0 0.0
          %1128 = vmatprep.subr.mxu0 0.0
          %1129 = vmatpush1.msra.mxu0 0.0
          %1130 = vmatprep.subr.mxu0 0.0
          %1131 = vmatpush1.msra.mxu0 0.0
          %1132 = vmatprep.subr.mxu0 0.0
          %1133 = vmatpush1.msra.mxu0 0.0
          %1134 = vmatprep.subr.mxu0 0.0
          %1135 = vmatpush1.msra.mxu0 0.0
          %1136 = vmatprep.subr.mxu0 0.0
          %1137 = vmatpush1.msra.mxu0 0.0
          %1138 = vmatprep.mubr.f32.mxu0 0.0
          %1139 = vmatmul.mubr.f32.gmra.mrb[0].mxu0 %v1072
          %v1140 = vpop.f32.mrb[0].mxu0
          %v1141 = vadd.f32 0.0, %v1140
          %v1142 = vpop.f32.mrb[0].mxu0
          %1143 = vdwg.mxu0
          %v1144 = vadd.f32 %v814, %v1141
        $region156: #{tpu_custom_call.1} parent=79 // loop_footer
          %s813 = sadd.s32 1, %s809
        $region157: #{tpu_custom_call.1} parent=79 // loop_footer_branch
          %808 = sbr.rel target = $region153
        $region158: #{tpu_custom_call.1} parent=79 // loop_exit
          _
        %v1145 = vld [vmem:[#allocation15] sm:$0x1]
        %v1147 = vlaneseq
        %v1148 = vshrl.u32 %v1147, 7
        %v1149 = vsub.s32 0, %v1148
        %v1150 = vrot.slane %v1145, %v1149
        %v1152 = vadd.f32 %v814, %v1150
        %v1153 = vadd.f32 %v807, %v1152
        %vm1154 = vcmask 261120
        %v1155 = vsel %vm1154, %v1153, 0.0
        %1156 = vadd.xlane.f32.xlu0 %v1155
        %v1157 = vpop.xlane.xlu0 %1156
        %v1158 = vrcp.pop 32.0
        %v1159 = vmul.f32 %v1157, %v1158
        %v1160 = vsub.f32 %v1153, %v1159
        %v1161 = vmul.f32 %v1160, %v1160
        %v1162 = vsel %vm1154, %v1161, 0.0
        %1163 = vadd.xlane.f32.xlu0 %v1162
        %v1164 = vpop.xlane.xlu0 %1163
        %v1165 = vmul.f32 %v1164, %v1158
        %v1166 = vadd.f32 %v1165, 1e-05
        %v1167 = vrsqrt.pop %v1166
        %v1168 = vmul.f32 %v1160, %v1167
        %v1169 = vld [vmem:[#allocation16] sm:$0x1]
        %v1171 = vlaneseq
        %v1172 = vshrl.u32 %v1171, 7
        %v1173 = vsub.s32 0, %v1172
        %v1174 = vrot.slane %v1169, %v1173
        %v1176 = vmul.f32 %v1168, %v1174
        %v1177 = vld [vmem:[#allocation18] sm:$0x1]
        %v1179 = vlaneseq
        %v1180 = vshrl.u32 %v1179, 7
        %v1181 = vsub.s32 0, %v1180
        %v1182 = vrot.slane %v1177, %v1181
        %v1184 = vadd.f32 %v1176, %v1182
        %v1185 = vld [vmem:[#allocation19] sm:$0xff]
        %v1186 = vld [vmem:[#allocation19 + $0x8] sm:$0xff]
        %v1187 = vld [vmem:[#allocation19 + $0x10] sm:$0xff]
        %v1188 = vld [vmem:[#allocation19 + $0x18] sm:$0xff]
        %v1189 = vld [vmem:[#allocation21] sm:$0x1]
        %v1191 = vlaneseq
        %v1192 = vshrl.u32 %v1191, 7
        %v1193 = vsub.s32 0, %v1192
        %v1194 = vrot.slane %v1189, %v1193
        %v1197 = vsel %vm1154, %v1184, 0
        %1199 = vmatprep.subr.mxu0 0.0
        %1200 = vmatpush1.msra.mxu0 %v1185
        %1201 = vmatprep.subr.mxu0 0.0
        %1202 = vmatpush1.msra.mxu0 %v1186
        %1203 = vmatprep.subr.mxu0 0.0
        %1204 = vmatpush1.msra.mxu0 %v1187
        %1205 = vmatprep.subr.mxu0 0.0
        %1206 = vmatpush1.msra.mxu0 %v1188
        %1207 = vmatprep.subr.mxu0 0.0
        %1208 = vmatpush1.msra.mxu0 0.0
        %1209 = vmatprep.subr.mxu0 0.0
        %1210 = vmatpush1.msra.mxu0 0.0
        %1211 = vmatprep.subr.mxu0 0.0
        %1212 = vmatpush1.msra.mxu0 0.0
        %1213 = vmatprep.subr.mxu0 0.0
        %1214 = vmatpush1.msra.mxu0 0.0
        %1215 = vmatprep.subr.mxu0 0.0
        %1216 = vmatpush1.msra.mxu0 0.0
        %1217 = vmatprep.subr.mxu0 0.0
        %1218 = vmatpush1.msra.mxu0 0.0
        %1219 = vmatprep.subr.mxu0 0.0
        %1220 = vmatpush1.msra.mxu0 0.0
        %1221 = vmatprep.subr.mxu0 0.0
        %1222 = vmatpush1.msra.mxu0 0.0
        %1223 = vmatprep.subr.mxu0 0.0
        %1224 = vmatpush1.msra.mxu0 0.0
        %1225 = vmatprep.subr.mxu0 0.0
        %1226 = vmatpush1.msra.mxu0 0.0
        %1227 = vmatprep.subr.mxu0 0.0
        %1228 = vmatpush1.msra.mxu0 0.0
        %1229 = vmatprep.subr.mxu0 0.0
        %1230 = vmatpush1.msra.mxu0 0.0
        %1231 = vmatprep.subr.mxu0 0.0
        %1232 = vmatpush1.msra.mxu0 0.0
        %1233 = vmatprep.subr.mxu0 0.0
        %1234 = vmatpush1.msra.mxu0 0.0
        %1235 = vmatprep.subr.mxu0 0.0
        %1236 = vmatpush1.msra.mxu0 0.0
        %1237 = vmatprep.subr.mxu0 0.0
        %1238 = vmatpush1.msra.mxu0 0.0
        %1239 = vmatprep.subr.mxu0 0.0
        %1240 = vmatpush1.msra.mxu0 0.0
        %1241 = vmatprep.subr.mxu0 0.0
        %1242 = vmatpush1.msra.mxu0 0.0
        %1243 = vmatprep.subr.mxu0 0.0
        %1244 = vmatpush1.msra.mxu0 0.0
        %1245 = vmatprep.subr.mxu0 0.0
        %1246 = vmatpush1.msra.mxu0 0.0
        %1247 = vmatprep.subr.mxu0 0.0
        %1248 = vmatpush1.msra.mxu0 0.0
        %1249 = vmatprep.subr.mxu0 0.0
        %1250 = vmatpush1.msra.mxu0 0.0
        %1251 = vmatprep.subr.mxu0 0.0
        %1252 = vmatpush1.msra.mxu0 0.0
        %1253 = vmatprep.subr.mxu0 0.0
        %1254 = vmatpush1.msra.mxu0 0.0
        %1255 = vmatprep.subr.mxu0 0.0
        %1256 = vmatpush1.msra.mxu0 0.0
        %1257 = vmatprep.subr.mxu0 0.0
        %1258 = vmatpush1.msra.mxu0 0.0
        %1259 = vmatprep.subr.mxu0 0.0
        %1260 = vmatpush1.msra.mxu0 0.0
        %1261 = vmatprep.subr.mxu0 0.0
        %1262 = vmatpush1.msra.mxu0 0.0
        %1263 = vmatprep.mubr.f32.mxu0 0.0
        %1264 = vmatmul.mubr.f32.gmra.mrb[0].mxu0 %v1197
        %v1265 = vpop.f32.mrb[0].mxu0
        %v1266 = vadd.f32 %v1194, %v1265
        %v1267 = vpop.f32.mrb[0].mxu0
        %1268 = vdwg.mxu0
        %v1269 = vmax.f32 %v1266, 0.0
        %v1270 = vld [vmem:[#allocation22] sm:$0xff]
        %v1271 = vld [vmem:[#allocation22 + $0x8] sm:$0xff]
        %v1272 = vld [vmem:[#allocation22 + $0x10] sm:$0xff]
        %v1273 = vld [vmem:[#allocation22 + $0x18] sm:$0xff]
        %v1274 = vld [vmem:[#allocation22 + $0x20] sm:$0xff]
        %v1275 = vld [vmem:[#allocation22 + $0x28] sm:$0xff]
        %v1276 = vld [vmem:[#allocation22 + $0x30] sm:$0xff]
        %v1277 = vld [vmem:[#allocation22 + $0x38] sm:$0xff]
        %v1278 = vld [vmem:[#allocation22 + $0x40] sm:$0xff]
        %v1279 = vld [vmem:[#allocation22 + $0x48] sm:$0xff]
        %v1280 = vld [vmem:[#allocation22 + $0x50] sm:$0xff]
        %v1281 = vld [vmem:[#allocation22 + $0x58] sm:$0xff]
        %v1282 = vld [vmem:[#allocation22 + $0x60] sm:$0xff]
        %v1283 = vld [vmem:[#allocation22 + $0x68] sm:$0xff]
        %v1284 = vld [vmem:[#allocation22 + $0x70] sm:$0xff]
        %v1285 = vld [vmem:[#allocation22 + $0x78] sm:$0xff]
        %v1286 = vld [vmem:[#allocation24] sm:$0x1]
        %v1288 = vlaneseq
        %v1289 = vshrl.u32 %v1288, 7
        %v1290 = vsub.s32 0, %v1289
        %v1291 = vrot.slane %v1286, %v1290
        %1293 = vmatprep.subr.mxu0 0.0
        %1294 = vmatpush1.msra.mxu0 %v1270
        %1295 = vmatprep.subr.mxu0 0.0
        %1296 = vmatpush1.msra.mxu0 %v1271
        %1297 = vmatprep.subr.mxu0 0.0
        %1298 = vmatpush1.msra.mxu0 %v1272
        %1299 = vmatprep.subr.mxu0 0.0
        %1300 = vmatpush1.msra.mxu0 %v1273
        %1301 = vmatprep.subr.mxu0 0.0
        %1302 = vmatpush1.msra.mxu0 %v1274
        %1303 = vmatprep.subr.mxu0 0.0
        %1304 = vmatpush1.msra.mxu0 %v1275
        %1305 = vmatprep.subr.mxu0 0.0
        %1306 = vmatpush1.msra.mxu0 %v1276
        %1307 = vmatprep.subr.mxu0 0.0
        %1308 = vmatpush1.msra.mxu0 %v1277
        %1309 = vmatprep.subr.mxu0 0.0
        %1310 = vmatpush1.msra.mxu0 %v1278
        %1311 = vmatprep.subr.mxu0 0.0
        %1312 = vmatpush1.msra.mxu0 %v1279
        %1313 = vmatprep.subr.mxu0 0.0
        %1314 = vmatpush1.msra.mxu0 %v1280
        %1315 = vmatprep.subr.mxu0 0.0
        %1316 = vmatpush1.msra.mxu0 %v1281
        %1317 = vmatprep.subr.mxu0 0.0
        %1318 = vmatpush1.msra.mxu0 %v1282
        %1319 = vmatprep.subr.mxu0 0.0
        %1320 = vmatpush1.msra.mxu0 %v1283
        %1321 = vmatprep.subr.mxu0 0.0
        %1322 = vmatpush1.msra.mxu0 %v1284
        %1323 = vmatprep.subr.mxu0 0.0
        %1324 = vmatpush1.msra.mxu0 %v1285
        %1325 = vmatprep.subr.mxu0 0.0
        %1326 = vmatpush1.msra.mxu0 0.0
        %1327 = vmatprep.subr.mxu0 0.0
        %1328 = vmatpush1.msra.mxu0 0.0
        %1329 = vmatprep.subr.mxu0 0.0
        %1330 = vmatpush1.msra.mxu0 0.0
        %1331 = vmatprep.subr.mxu0 0.0
        %1332 = vmatpush1.msra.mxu0 0.0
        %1333 = vmatprep.subr.mxu0 0.0
        %1334 = vmatpush1.msra.mxu0 0.0
        %1335 = vmatprep.subr.mxu0 0.0
        %1336 = vmatpush1.msra.mxu0 0.0
        %1337 = vmatprep.subr.mxu0 0.0
        %1338 = vmatpush1.msra.mxu0 0.0
        %1339 = vmatprep.subr.mxu0 0.0
        %1340 = vmatpush1.msra.mxu0 0.0
        %1341 = vmatprep.subr.mxu0 0.0
        %1342 = vmatpush1.msra.mxu0 0.0
        %1343 = vmatprep.subr.mxu0 0.0
        %1344 = vmatpush1.msra.mxu0 0.0
        %1345 = vmatprep.subr.mxu0 0.0
        %1346 = vmatpush1.msra.mxu0 0.0
        %1347 = vmatprep.subr.mxu0 0.0
        %1348 = vmatpush1.msra.mxu0 0.0
        %1349 = vmatprep.subr.mxu0 0.0
        %1350 = vmatpush1.msra.mxu0 0.0
        %1351 = vmatprep.subr.mxu0 0.0
        %1352 = vmatpush1.msra.mxu0 0.0
        %1353 = vmatprep.subr.mxu0 0.0
        %1354 = vmatpush1.msra.mxu0 0.0
        %1355 = vmatprep.subr.mxu0 0.0
        %1356 = vmatpush1.msra.mxu0 0.0
        %1357 = vmatprep.mubr.f32.mxu0 0.0
        %1358 = vmatmul.mubr.f32.gmra.mrb[0].mxu0 %v1269
        %v1359 = vpop.f32.mrb[0].mxu0
        %v1360 = vadd.f32 %v1291, %v1359
        %v1361 = vpop.f32.mrb[0].mxu0
        %1362 = vdwg.mxu0
        %v1363 = vadd.f32 %v1184, %v1360
        %v1364 = vsel %vm1154, %v1363, 0.0
        %1365 = vadd.xlane.f32.xlu0 %v1364
        %v1366 = vpop.xlane.xlu0 %1365
        %v1367 = vmul.f32 %v1366, %v1158
        %v1368 = vsub.f32 %v1363, %v1367
        %v1369 = vmul.f32 %v1368, %v1368
        %v1370 = vsel %vm1154, %v1369, 0.0
        %1371 = vadd.xlane.f32.xlu0 %v1370
        %v1372 = vpop.xlane.xlu0 %1371
        %v1373 = vmul.f32 %v1372, %v1158
        %v1374 = vadd.f32 %v1373, 1e-05
        %v1375 = vrsqrt.pop %v1374
        %v1376 = vmul.f32 %v1368, %v1375
        %v1377 = vld [vmem:[#allocation25] sm:$0x1]
        %v1379 = vlaneseq
        %v1380 = vshrl.u32 %v1379, 7
        %v1381 = vsub.s32 0, %v1380
        %v1382 = vrot.slane %v1377, %v1381
        %v1384 = vmul.f32 %v1376, %v1382
        %v1385 = vld [vmem:[#allocation27] sm:$0x1]
        %v1387 = vlaneseq
        %v1388 = vshrl.u32 %v1387, 7
        %v1389 = vsub.s32 0, %v1388
        %v1390 = vrot.slane %v1385, %v1389
        %v1392 = vadd.f32 %v1384, %v1390
        %1393 = vst.msk [vmem:[%s695] sm:$0xff] %vm1154, %v1392
        %s1394 = sand.u32 %s379, 1
        %s1395 = scalar_lea.sflag [#allocation6], %s1394
        %s1396 = sand.u32 %s379, 1
        %s1397 = smul.addr %s1396, 8
        %s1398 = scalar_lea.vmem [#allocation28], %s1397
        // Predicated region
        $region159: #{tpu_custom_call.1} parent=79 // pred_check
          %p1399 = pneg %p389
        $region160: #{tpu_custom_call.1} parent=79 // pred_check_branch
          %1401 = sbr.rel (%p1399) target = $region162
        $region161: #{tpu_custom_call.1} parent=79 // pred_region
          %s1403 = ssub.s32 128, 128
          %1404 = vsyncadd %s1395, %s1403
          %s1405 = sadd.s32 %s42, %s41
          %s1406 = smul.addr %s1405, 128
          %s1407 = scalar_lea.hbm %s15, %s1406
          %s1409 = sshll.u32 %s1398, 4
          %s1410 = int_to_ptr.vmem [resolvable:$true] %s1409
          %1412 = dma.vmem_to_hbm [thread:$0]  %s1410, 128, %s1407, %s1395
        $region162: #{tpu_custom_call.1} parent=79 // pred_fallthru
          _
      $region80: #{tpu_custom_call.1} parent=5 // pred_fallthru
        _
      %p1413 = scmp.le.s32.totalorder 2, %s32
      // Predicated region
      $region163: #{tpu_custom_call.1} parent=5 // pred_check
        %p1414 = pneg %p1413
      $region164: #{tpu_custom_call.1} parent=5 // pred_check_branch
        %1416 = sbr.rel (%p1414) target = $region166
      $region165: #{tpu_custom_call.1} parent=5 // pred_region
        %s1417 = ssub.s32 %s32, 2
        // Predicated region
        $region167: #{tpu_custom_call.1} parent=165 // pred_check
          %p1418 = pneg %p395
        $region168: #{tpu_custom_call.1} parent=165 // pred_check_branch
          %1420 = sbr.rel (%p1418) target = $region170
        $region169: #{tpu_custom_call.1} parent=165 // pred_region
          %s1421 = sand.u32 %s380, 1
          %s1422 = scalar_lea.sflag [#allocation6], %s1421
          %s1423 = sand.u32 %s380, 1
          %s1424 = smul.addr %s1423, 8
          %s1425 = scalar_lea.vmem [#allocation28], %s1424
          %1426 = dma.done %s1422, 128
        $region170: #{tpu_custom_call.1} parent=165 // pred_fallthru
          _
      $region166: #{tpu_custom_call.1} parent=5 // pred_fallthru
        _
    $region6: #{tpu_custom_call.1} parent=1 // loop_footer
      %s36 = sadd.s32 1, %s32
    $region7: #{tpu_custom_call.1} parent=1 // loop_footer_branch
      %31 = sbr.rel target = $region3
    $region8: #{tpu_custom_call.1} parent=1 // loop_exit
      _
    %1427 = vsyncpa [#allocation5], 1
    %s1428 = scalar_lea.sflag [#allocation5], 1
    %1429 = vsyncpa %s1428, 1
    %1430 = vsyncpa [#allocation8], 1
    %1431 = vsyncpa [#allocation11], 1
    %1432 = vsyncpa [#allocation14], 1
    %1433 = vsyncpa [#allocation17], 1
    %1434 = vsyncpa [#allocation20], 1
    %1435 = vsyncpa [#allocation23], 1
    %1436 = vsyncpa [#allocation26], 1
    %1437 = vsyncpa [#allocation6], 1
    %s1438 = scalar_lea.sflag [#allocation6], 1
    %1439 = vsyncpa %s1438, 1

</llo_original>
